<compile_context>
chip_gen: v5e
topology: v5e:2x2
jax: 0.10.0
libtpu: 0.0.40
codegen_flags: <defaults>
</compile_context>

<pallas_src>
import functools
import math

import numpy as np
import jax
import jax.numpy as jnp
from jax import lax
from jax.experimental import pallas as pl
from jax.experimental.pallas import tpu as pltpu


# ---------------------------------------------------------------------------
# Kernel 1: fused GroupNorm-apply + q/k/v 1x1-conv projections.
#   grid = (B, N // tp); every axis independent ("parallel", "parallel").
# ---------------------------------------------------------------------------
def _qkv_proj_kernel(x_ref, scale_ref, shift_ref,
                     wq_ref, wk_ref, wv_ref, bq_ref, bk_ref, bv_ref,
                     q_ref, k_ref, v_ref, *, sm_scale):
    # (tp, C) f32 * (1, C) + (1, C) -> bf16 MXU operand
    xn = (x_ref[...] * scale_ref[...] + shift_ref[...]).astype(jnp.bfloat16)
    q = jnp.dot(xn, wq_ref[...], preferred_element_type=jnp.float32) + bq_ref[...]
    q_ref[...] = (q * sm_scale).astype(jnp.bfloat16)          # pre-scaled query
    k = jnp.dot(xn, wk_ref[...], preferred_element_type=jnp.float32) + bk_ref[...]
    k_ref[...] = k.astype(jnp.bfloat16)
    v = jnp.dot(xn, wv_ref[...], preferred_element_type=jnp.float32) + bv_ref[...]
    v_ref[...] = v.astype(jnp.bfloat16)


# ---------------------------------------------------------------------------
# Kernel 2: flash attention (online softmax over an in-kernel kv loop) fused
# with the output projection and the residual add.
#   grid = (B, N // tq); every axis independent ("parallel", "parallel").
# ---------------------------------------------------------------------------
def _flash_attn_kernel(q_ref, k_ref, v_ref, xres_ref, wp_ref, bp_ref, o_ref,
                       *, tk, nk):
    tq, C = q_ref.shape
    q = q_ref[...]                                            # (tq, C) bf16

    def body(i, carry):
        m_prev, l_prev, acc_prev = carry
        start = pl.multiple_of(i * tk, tk)
        k_t = k_ref[pl.ds(start, tk), :]                      # (tk, C) bf16
        v_t = v_ref[pl.ds(start, tk), :]
        # contract last dims directly; no explicit k.T
        s = lax.dot_general(q, k_t, (((1,), (1,)), ((), ())),
                            preferred_element_type=jnp.float32)   # (tq, tk) f32
        m_new = jnp.maximum(m_prev, jnp.max(s, axis=-1, keepdims=True))
        alpha = jnp.exp(m_prev - m_new)
        p = jnp.exp(s - m_new)
        l_new = alpha * l_prev + jnp.sum(p, axis=-1, keepdims=True)
        acc_new = alpha * acc_prev + jnp.dot(p.astype(jnp.bfloat16), v_t,
                                             preferred_element_type=jnp.float32)
        return m_new, l_new, acc_new

    m0 = jnp.full((tq, 1), -jnp.inf, dtype=jnp.float32)
    l0 = jnp.zeros((tq, 1), dtype=jnp.float32)
    a0 = jnp.zeros((tq, C), dtype=jnp.float32)
    _, l_fin, acc = lax.fori_loop(0, nk, body, (m0, l0, a0), unroll=nk <= 8)

    # approx reciprocal: ~1e-3-level relative error on the softmax denominator
    # (fine for this block; document if it feeds a tighter-tolerance consumer).
    attn = acc * pl.reciprocal(l_fin, approx=True)
    h = jnp.dot(attn.astype(jnp.bfloat16), wp_ref[...],
                preferred_element_type=jnp.float32) + bp_ref[...]
    o_ref[...] = (xres_ref[...] + h).astype(o_ref.dtype)


# ---------------------------------------------------------------------------
# Wrapper helpers
# ---------------------------------------------------------------------------
def _pick_tile(n, prefer):
    for t in (1024, 512, 256, 128, 64, 32, 16, 8):
        if t <= prefer and n % t == 0:
            return t
    # TODO(synk): pad N to a multiple of 8 (and mask the tail) instead of
    # falling back to a full-length / oddly sized block for awkward H*W.
    return n


def _vmem_cap_bytes():
    """Physical VMEM per core (used with ~15% headroom for compiler scratch)."""
    try:
        cap = getattr(pltpu.get_tpu_info(), "vmem_capacity_bytes", None)
        if cap:
            return int(cap)
    except Exception:
        pass
    return 64 * 1024 * 1024  # conservative (v7x-sized) default


def _spec(shape, index_map, *, single_buffer=False):
    """BlockSpec, optionally single-buffered (for grid-constant operands)."""
    if single_buffer:
        try:
            return pl.BlockSpec(shape, index_map, pipeline_mode=pl.Buffered(1))
        except (TypeError, AttributeError):
            pass  # older jax without pipeline_mode; fall back to default
    return pl.BlockSpec(shape, index_map)


def attn_block_forward(x_nchw, params, *, tq=None, tk=None, tp=None):
    """AttnBlock forward. x_nchw: (B, C, H, W). Returns (B, C, H, W)."""
    B, C, H, W = x_nchw.shape
    N = H * W
    G = 32
    assert C % G == 0, "GroupNorm(32) requires channels divisible by 32"
    cs = C // G
    sm_scale = 1.0 / math.sqrt(C)

    # NCHW -> (B, N, C); channels on the 128-wide lane axis.
    # TODO(synk): if the surrounding model carries NHWC, drop this round trip.
    x = jnp.transpose(x_nchw, (0, 2, 3, 1)).reshape(B, N, C).astype(jnp.float32)

    # GroupNorm stats in ONE fused pass over x (E[x^2] - mean^2), folded with
    # the affine into per-(batch, channel) scale/shift vectors.
    xg = x.reshape(B, N, G, cs)
    s1 = jnp.mean(xg, axis=(1, 3))                            # (B, G)
    s2 = jnp.mean(jnp.square(xg), axis=(1, 3))                # (B, G)
    var = jnp.maximum(s2 - jnp.square(s1), 0.0)
    inv = lax.rsqrt(var + 1e-6)                               # (B, G)
    inv_c = jnp.repeat(inv, cs, axis=1)                       # (B, C)
    mean_c = jnp.repeat(s1, cs, axis=1)                       # (B, C)
    gamma = jnp.asarray(params["gamma"]).reshape(1, C).astype(jnp.float32)
    beta = jnp.asarray(params["beta"]).reshape(1, C).astype(jnp.float32)
    scale = (inv_c * gamma).reshape(B, 1, C)
    shift = (beta - mean_c * inv_c * gamma).reshape(B, 1, C)

    # 1x1-conv weights (C_out, C_in, 1, 1) -> (C_in, C_out) bf16 for the MXU.
    def prep_w(name):
        return jnp.asarray(params[name]).reshape(C, C).T.astype(jnp.bfloat16)

    def prep_b(name):
        return jnp.asarray(params[name]).reshape(1, C).astype(jnp.float32)

    wq, wk, wv, wp = (prep_w(n) for n in ("wq", "wk", "wv", "wp"))
    bq, bk, bv, bp = (prep_b(n) for n in ("bq", "bk", "bv", "bp"))

    tp = tp or _pick_tile(N, 512)
    tq = tq or _pick_tile(N, 512)   # large M-tile keeps the MXU fed
    tk = tk or _pick_tile(N, 128)   # small kv-tile bounds (tq, tk) f32 spill
    n_p, nq, nk = N // tp, N // tq, N // tk

    cap = _vmem_cap_bytes()
    vmem_ceiling = int(cap * 0.85)   # headroom for compiler-internal scratch

    # ---------------- kernel 1: GroupNorm apply + q/k/v projections --------
    proj_need = (2 * tp * C * 4                    # x tile (double-buffered)
                 + 4 * C * 4                       # scale / shift
                 + 3 * (C * C * 2 + C * 4)         # weights + biases (1-buf)
                 + 3 * 2 * tp * C * 2              # q/k/v out tiles
                 + 3 * tp * C * 4)                 # f32 temporaries
    proj_vmem = int(min(max(2 * proj_need, 32 << 20), vmem_ceiling))
    proj_cost = pl.CostEstimate(
        flops=int(6 * B * N * C * C), transcendentals=0,
        bytes_accessed=int(B * N * C * 4 + 3 * B * N * C * 2 + 3 * C * C * 2))

    row = lambda t: _spec((None, t, C), lambda b, i: (b, i, 0))
    bcast = _spec((None, 1, C), lambda b, i: (b, 0, 0))

    q_bf, k_bf, v_bf = pl.pallas_call(
        functools.partial(_qkv_proj_kernel, sm_scale=sm_scale),
        out_shape=(jax.ShapeDtypeStruct((B, N, C), jnp.bfloat16),
                   jax.ShapeDtypeStruct((B, N, C), jnp.bfloat16),
                   jax.ShapeDtypeStruct((B, N, C), jnp.bfloat16)),
        grid_spec=pltpu.PrefetchScalarGridSpec(
            num_scalar_prefetch=0,
            grid=(B, n_p),
            in_specs=[row(tp), bcast, bcast,
                      _spec((C, C), lambda b, i: (0, 0), single_buffer=True),
                      _spec((C, C), lambda b, i: (0, 0), single_buffer=True),
                      _spec((C, C), lambda b, i: (0, 0), single_buffer=True),
                      _spec((1, C), lambda b, i: (0, 0), single_buffer=True),
                      _spec((1, C), lambda b, i: (0, 0), single_buffer=True),
                      _spec((1, C), lambda b, i: (0, 0), single_buffer=True)],
            out_specs=[row(tp), row(tp), row(tp)],
        ),
        compiler_params=pltpu.CompilerParams(
            dimension_semantics=("parallel", "parallel"),
            vmem_limit_bytes=proj_vmem),
        cost_estimate=proj_cost,
    )(x, scale, shift, wq, wk, wv, bq, bk, bv)

    # ---------------- kernel 2: flash attention + out-proj + residual ------
    # K/V stay resident per batch element; single-buffer them when the
    # double-buffered copy would eat more than half the VMEM budget.
    kv_db_bytes = 2 * 2 * N * C * 2
    single_buffer_kv = kv_db_bytes > vmem_ceiling // 2
    # TODO(synk): for feature maps where even a single K/V copy approaches the
    # VMEM budget, stream K/V tiles from HBM (memory_space=pl.ANY + manual DMA).
    kv_spec = _spec((None, N, C), lambda b, qi: (b, 0, 0),
                    single_buffer=single_buffer_kv)
    kv_factor = 1 if single_buffer_kv else 2

    attn_need = (2 * tq * C * 2                    # q tile
                 + kv_factor * 2 * N * C * 2       # K + V resident
                 + 2 * tq * C * 4                  # residual x tile
                 + C * C * 2 + C * 4               # wp / bp (single-buffered)
                 + 2 * tq * C * 4                  # output tile
                 + tq * C * 4 + tq * C * 2         # acc carry + bf16 temps
                 + 2 * tq * tk * 4)                # s / p temporaries
    attn_vmem = int(min(max(int(1.5 * attn_need), 32 << 20), vmem_ceiling))
    attn_cost = pl.CostEstimate(
        flops=int(B * (4 * N * N * C + 2 * N * C * C)),
        transcendentals=int(B * N * N),
        bytes_accessed=int(3 * B * N * C * 2 + 2 * B * N * C * 4 + C * C * 2))

    out = pl.pallas_call(
        functools.partial(_flash_attn_kernel, tk=tk, nk=nk),
        out_shape=jax.ShapeDtypeStruct((B, N, C), jnp.float32),
        grid_spec=pltpu.PrefetchScalarGridSpec(
            num_scalar_prefetch=0,
            grid=(B, nq),
            in_specs=[_spec((None, tq, C), lambda b, qi: (b, qi, 0)),   # q
                      kv_spec,                                          # K
                      kv_spec,                                          # V
                      _spec((None, tq, C), lambda b, qi: (b, qi, 0)),   # x res
                      _spec((C, C), lambda b, qi: (0, 0), single_buffer=True),
                      _spec((1, C), lambda b, qi: (0, 0), single_buffer=True)],
            out_specs=_spec((None, tq, C), lambda b, qi: (b, qi, 0)),
        ),
        compiler_params=pltpu.CompilerParams(
            # Both axes independent (K/V precomputed) -> megacore sharding on
            # v7x even when B == 1.
            dimension_semantics=("parallel", "parallel"),
            vmem_limit_bytes=attn_vmem),
        cost_estimate=attn_cost,
    )(q_bf, k_bf, v_bf, x, wp, bp)

    # (B, N, C) -> NCHW
    return jnp.transpose(out.reshape(B, H, W, C), (0, 3, 1, 2)).astype(x_nchw.dtype)


def attn_block_reference(x_nchw, params):
    """Pure-JAX f32 reference (mirrors the PyTorch module)."""
    B, C, H, W = x_nchw.shape
    N = H * W
    G, cs = 32, C // 32
    x = jnp.transpose(x_nchw, (0, 2, 3, 1)).reshape(B, N, C)

    xg = x.reshape(B, N, G, cs)
    mean = xg.mean(axis=(1, 3), keepdims=True)
    var = ((xg - mean) ** 2).mean(axis=(1, 3), keepdims=True)
    xn = ((xg - mean) / jnp.sqrt(var + 1e-6)).reshape(B, N, C)
    xn = xn * params["gamma"].reshape(1, 1, C) + params["beta"].reshape(1, 1, C)

    def proj(w, b):
        return jnp.einsum("bnc,oc->bno", xn, w.reshape(C, C)) + b.reshape(1, 1, C)

    q = proj(params["wq"], params["bq"])
    k = proj(params["wk"], params["bk"])
    v = proj(params["wv"], params["bv"])
    s = jnp.einsum("bnc,bmc->bnm", q, k) / math.sqrt(C)
    p = jax.nn.softmax(s, axis=-1)
    a = jnp.einsum("bnm,bmc->bnc", p, v)
    h = jnp.einsum("bnc,oc->bno", a, params["wp"].reshape(C, C)) + params["bp"].reshape(1, 1, C)
    out = x + h
    return jnp.transpose(out.reshape(B, H, W, C), (0, 3, 1, 2))


if __name__ == "__main__":
    # GroupNorm(32) needs channels divisible by 32 -> C=64 (2 groups).
    # H=W=16 -> N=256 so the kv fori_loop runs >1 iteration (tk=128, nk=2).
    B, C, H, W = 2, 64, 16, 16
    key = jax.random.PRNGKey(0)
    keys = jax.random.split(key, 12)

    x = jax.random.normal(keys[0], (B, C, H, W), dtype=jnp.float32)

    def winit(k):
        return jax.random.normal(k, (C, C, 1, 1), dtype=jnp.float32) * (1.0 / math.sqrt(C))

    params = {
        "gamma": 1.0 + 0.1 * jax.random.normal(keys[1], (C,), dtype=jnp.float32),
        "beta": 0.1 * jax.random.normal(keys[2], (C,), dtype=jnp.float32),
        "wq": winit(keys[3]), "bq": 0.01 * jax.random.normal(keys[4], (C,), dtype=jnp.float32),
        "wk": winit(keys[5]), "bk": 0.01 * jax.random.normal(keys[6], (C,), dtype=jnp.float32),
        "wv": winit(keys[7]), "bv": 0.01 * jax.random.normal(keys[8], (C,), dtype=jnp.float32),
        "wp": winit(keys[9]), "bp": 0.01 * jax.random.normal(keys[10], (C,), dtype=jnp.float32),
    }

    out = jax.block_until_ready(attn_block_forward(x, params))
    ref = jax.block_until_ready(attn_block_reference(x, params))

    assert out.shape == (B, C, H, W)
    # bf16 MXU operands (q/k/v stored in bf16) with f32 accumulation ->
    # ~1e-2-level absolute error vs. the pure-f32 reference at these magnitudes.
    np.testing.assert_allclose(np.asarray(out), np.asarray(ref), atol=5e-2, rtol=5e-2)
    print("KERNEL_OK")
</pallas_src>

<mosaic_0001>
module attributes {stable_mosaic.version = 11 : i64} {
  func.func @_qkv_proj_kernel(%arg0: i32, %arg1: i32, %arg2: memref<1x256x64xf32, #tpu.memory_space<vmem>>, %arg3: memref<1x1x64xf32, #tpu.memory_space<vmem>>, %arg4: memref<1x1x64xf32, #tpu.memory_space<vmem>>, %arg5: memref<64x64xbf16, #tpu.memory_space<vmem>>, %arg6: memref<64x64xbf16, #tpu.memory_space<vmem>>, %arg7: memref<64x64xbf16, #tpu.memory_space<vmem>>, %arg8: memref<1x64xf32, #tpu.memory_space<vmem>>, %arg9: memref<1x64xf32, #tpu.memory_space<vmem>>, %arg10: memref<1x64xf32, #tpu.memory_space<vmem>>, %arg11: memref<1x256x64xbf16, #tpu.memory_space<vmem>>, %arg12: memref<1x256x64xbf16, #tpu.memory_space<vmem>>, %arg13: memref<1x256x64xbf16, #tpu.memory_space<vmem>>) attributes {dimension_semantics = [#tpu.dimension_semantics<parallel>, #tpu.dimension_semantics<parallel>], iteration_bounds = array<i64: 2, 1>, scalar_prefetch = 0 : i64, scratch_operands = 0 : i64, tpu.core_type = #tpu.core_type<tc>, window_params = [{transform_indices = @transform_0, window_bounds = array<i64: 1, 256, 64>}, {transform_indices = @transform_1, window_bounds = array<i64: 1, 1, 64>}, {transform_indices = @transform_2, window_bounds = array<i64: 1, 1, 64>}, {pipeline_mode = #tpu.pipeline_mode<synchronous>, transform_indices = @transform_3, window_bounds = array<i64: 64, 64>}, {pipeline_mode = #tpu.pipeline_mode<synchronous>, transform_indices = @transform_4, window_bounds = array<i64: 64, 64>}, {pipeline_mode = #tpu.pipeline_mode<synchronous>, transform_indices = @transform_5, window_bounds = array<i64: 64, 64>}, {pipeline_mode = #tpu.pipeline_mode<synchronous>, transform_indices = @transform_6, window_bounds = array<i64: 1, 64>}, {pipeline_mode = #tpu.pipeline_mode<synchronous>, transform_indices = @transform_7, window_bounds = array<i64: 1, 64>}, {pipeline_mode = #tpu.pipeline_mode<synchronous>, transform_indices = @transform_8, window_bounds = array<i64: 1, 64>}, {transform_indices = @transform_9, window_bounds = array<i64: 1, 256, 64>}, {transform_indices = @transform_10, window_bounds = array<i64: 1, 256, 64>}, {transform_indices = @transform_11, window_bounds = array<i64: 1, 256, 64>}]} {
    %c0 = arith.constant 0 : index
    %c0_0 = arith.constant 0 : index
    %c0_1 = arith.constant 0 : index
    %0 = vector.load %arg2[%c0, %c0_0, %c0_1] : memref<1x256x64xf32, #tpu.memory_space<vmem>>, vector<1x256x64xf32>
    %1 = vector.shape_cast %0 : vector<1x256x64xf32> to vector<256x64xf32>
    %c0_2 = arith.constant 0 : index
    %c0_3 = arith.constant 0 : index
    %c0_4 = arith.constant 0 : index
    %2 = vector.load %arg3[%c0_2, %c0_3, %c0_4] : memref<1x1x64xf32, #tpu.memory_space<vmem>>, vector<1x1x64xf32>
    %3 = vector.shape_cast %2 : vector<1x1x64xf32> to vector<1x64xf32>
    %4 = vector.broadcast %3 : vector<1x64xf32> to vector<256x64xf32>
    %5 = arith.mulf %1, %4 : vector<256x64xf32>
    %c0_5 = arith.constant 0 : index
    %c0_6 = arith.constant 0 : index
    %c0_7 = arith.constant 0 : index
    %6 = vector.load %arg4[%c0_5, %c0_6, %c0_7] : memref<1x1x64xf32, #tpu.memory_space<vmem>>, vector<1x1x64xf32>
    %7 = vector.shape_cast %6 : vector<1x1x64xf32> to vector<1x64xf32>
    %8 = vector.broadcast %7 : vector<1x64xf32> to vector<256x64xf32>
    %9 = arith.addf %5, %8 : vector<256x64xf32>
    %10 = arith.truncf %9 : vector<256x64xf32> to vector<256x64xbf16>
    %c0_8 = arith.constant 0 : index
    %c0_9 = arith.constant 0 : index
    %11 = vector.load %arg5[%c0_8, %c0_9] : memref<64x64xbf16, #tpu.memory_space<vmem>>, vector<64x64xbf16>
    %cst = arith.constant dense<0.000000e+00> : vector<256x64xf32>
    %12 = tpu.matmul %10, %11, %cst {dimension_numbers = #tpu.dot_dimension_numbers<[1], [0], [0], [1], [0, 0, 1, 1], [], []>} : vector<256x64xbf16>, vector<64x64xbf16>, vector<256x64xf32> -> vector<256x64xf32>
    %c0_10 = arith.constant 0 : index
    %c0_11 = arith.constant 0 : index
    %13 = vector.load %arg8[%c0_10, %c0_11] : memref<1x64xf32, #tpu.memory_space<vmem>>, vector<1x64xf32>
    %14 = vector.broadcast %13 : vector<1x64xf32> to vector<256x64xf32>
    %15 = arith.addf %12, %14 : vector<256x64xf32>
    %cst_12 = arith.constant 1.250000e-01 : f32
    %16 = vector.broadcast %cst_12 : f32 to vector<256x64xf32>
    %17 = arith.mulf %15, %16 : vector<256x64xf32>
    %18 = arith.truncf %17 : vector<256x64xf32> to vector<256x64xbf16>
    %c0_13 = arith.constant 0 : index
    %c0_14 = arith.constant 0 : index
    %c0_15 = arith.constant 0 : index
    %19 = vector.load %arg11[%c0_13, %c0_14, %c0_15] : memref<1x256x64xbf16, #tpu.memory_space<vmem>>, vector<1x256x64xbf16>
    %20 = vector.shape_cast %19 : vector<1x256x64xbf16> to vector<256x64xbf16>
    %21 = vector.shape_cast %18 : vector<256x64xbf16> to vector<1x256x64xbf16>
    tpu.vector_store %arg11[%c0_13, %c0_14, %c0_15], %21 {strides = array<i32>} : memref<1x256x64xbf16, #tpu.memory_space<vmem>>, vector<1x256x64xbf16>,
    %c0_16 = arith.constant 0 : index
    %c0_17 = arith.constant 0 : index
    %22 = vector.load %arg6[%c0_16, %c0_17] : memref<64x64xbf16, #tpu.memory_space<vmem>>, vector<64x64xbf16>
    %cst_18 = arith.constant dense<0.000000e+00> : vector<256x64xf32>
    %23 = tpu.matmul %10, %22, %cst_18 {dimension_numbers = #tpu.dot_dimension_numbers<[1], [0], [0], [1], [0, 0, 1, 1], [], []>} : vector<256x64xbf16>, vector<64x64xbf16>, vector<256x64xf32> -> vector<256x64xf32>
    %c0_19 = arith.constant 0 : index
    %c0_20 = arith.constant 0 : index
    %24 = vector.load %arg9[%c0_19, %c0_20] : memref<1x64xf32, #tpu.memory_space<vmem>>, vector<1x64xf32>
    %25 = vector.broadcast %24 : vector<1x64xf32> to vector<256x64xf32>
    %26 = arith.addf %23, %25 : vector<256x64xf32>
    %27 = arith.truncf %26 : vector<256x64xf32> to vector<256x64xbf16>
    %c0_21 = arith.constant 0 : index
    %c0_22 = arith.constant 0 : index
    %c0_23 = arith.constant 0 : index
    %28 = vector.load %arg12[%c0_21, %c0_22, %c0_23] : memref<1x256x64xbf16, #tpu.memory_space<vmem>>, vector<1x256x64xbf16>
    %29 = vector.shape_cast %28 : vector<1x256x64xbf16> to vector<256x64xbf16>
    %30 = vector.shape_cast %27 : vector<256x64xbf16> to vector<1x256x64xbf16>
    tpu.vector_store %arg12[%c0_21, %c0_22, %c0_23], %30 {strides = array<i32>} : memref<1x256x64xbf16, #tpu.memory_space<vmem>>, vector<1x256x64xbf16>,
    %c0_24 = arith.constant 0 : index
    %c0_25 = arith.constant 0 : index
    %31 = vector.load %arg7[%c0_24, %c0_25] : memref<64x64xbf16, #tpu.memory_space<vmem>>, vector<64x64xbf16>
    %cst_26 = arith.constant dense<0.000000e+00> : vector<256x64xf32>
    %32 = tpu.matmul %10, %31, %cst_26 {dimension_numbers = #tpu.dot_dimension_numbers<[1], [0], [0], [1], [0, 0, 1, 1], [], []>} : vector<256x64xbf16>, vector<64x64xbf16>, vector<256x64xf32> -> vector<256x64xf32>
    %c0_27 = arith.constant 0 : index
    %c0_28 = arith.constant 0 : index
    %33 = vector.load %arg10[%c0_27, %c0_28] : memref<1x64xf32, #tpu.memory_space<vmem>>, vector<1x64xf32>
    %34 = vector.broadcast %33 : vector<1x64xf32> to vector<256x64xf32>
    %35 = arith.addf %32, %34 : vector<256x64xf32>
    %36 = arith.truncf %35 : vector<256x64xf32> to vector<256x64xbf16>
    %c0_29 = arith.constant 0 : index
    %c0_30 = arith.constant 0 : index
    %c0_31 = arith.constant 0 : index
    %37 = vector.load %arg13[%c0_29, %c0_30, %c0_31] : memref<1x256x64xbf16, #tpu.memory_space<vmem>>, vector<1x256x64xbf16>
    %38 = vector.shape_cast %37 : vector<1x256x64xbf16> to vector<256x64xbf16>
    %39 = vector.shape_cast %36 : vector<256x64xbf16> to vector<1x256x64xbf16>
    tpu.vector_store %arg13[%c0_29, %c0_30, %c0_31], %39 {strides = array<i32>} : memref<1x256x64xbf16, #tpu.memory_space<vmem>>, vector<1x256x64xbf16>,
    return
  }
  func.func @transform_0(%arg0: i32, %arg1: i32) -> (i32, i32, i32) {
    %c0_i32 = arith.constant 0 : i32
    %c0_i32_0 = arith.constant 0 : i32
    return %arg0, %arg1, %c0_i32 : i32, i32, i32
  }
  func.func @transform_1(%arg0: i32, %arg1: i32) -> (i32, i32, i32) {
    %c0_i32 = arith.constant 0 : i32
    %c0_i32_0 = arith.constant 0 : i32
    %c0_i32_1 = arith.constant 0 : i32
    return %arg0, %c0_i32, %c0_i32_0 : i32, i32, i32
  }
  func.func @transform_2(%arg0: i32, %arg1: i32) -> (i32, i32, i32) {
    %c0_i32 = arith.constant 0 : i32
    %c0_i32_0 = arith.constant 0 : i32
    %c0_i32_1 = arith.constant 0 : i32
    return %arg0, %c0_i32, %c0_i32_0 : i32, i32, i32
  }
  func.func @transform_3(%arg0: i32, %arg1: i32) -> (i32, i32) {
    %c0_i32 = arith.constant 0 : i32
    %c0_i32_0 = arith.constant 0 : i32
    %c0_i32_1 = arith.constant 0 : i32
    return %c0_i32, %c0_i32_0 : i32, i32
  }
  func.func @transform_4(%arg0: i32, %arg1: i32) -> (i32, i32) {
    %c0_i32 = arith.constant 0 : i32
    %c0_i32_0 = arith.constant 0 : i32
    %c0_i32_1 = arith.constant 0 : i32
    return %c0_i32, %c0_i32_0 : i32, i32
  }
  func.func @transform_5(%arg0: i32, %arg1: i32) -> (i32, i32) {
    %c0_i32 = arith.constant 0 : i32
    %c0_i32_0 = arith.constant 0 : i32
    %c0_i32_1 = arith.constant 0 : i32
    return %c0_i32, %c0_i32_0 : i32, i32
  }
  func.func @transform_6(%arg0: i32, %arg1: i32) -> (i32, i32) {
    %c0_i32 = arith.constant 0 : i32
    %c0_i32_0 = arith.constant 0 : i32
    %c0_i32_1 = arith.constant 0 : i32
    return %c0_i32, %c0_i32_0 : i32, i32
  }
  func.func @transform_7(%arg0: i32, %arg1: i32) -> (i32, i32) {
    %c0_i32 = arith.constant 0 : i32
    %c0_i32_0 = arith.constant 0 : i32
    %c0_i32_1 = arith.constant 0 : i32
    return %c0_i32, %c0_i32_0 : i32, i32
  }
  func.func @transform_8(%arg0: i32, %arg1: i32) -> (i32, i32) {
    %c0_i32 = arith.constant 0 : i32
    %c0_i32_0 = arith.constant 0 : i32
    %c0_i32_1 = arith.constant 0 : i32
    return %c0_i32, %c0_i32_0 : i32, i32
  }
  func.func @transform_9(%arg0: i32, %arg1: i32) -> (i32, i32, i32) {
    %c0_i32 = arith.constant 0 : i32
    %c0_i32_0 = arith.constant 0 : i32
    return %arg0, %arg1, %c0_i32 : i32, i32, i32
  }
  func.func @transform_10(%arg0: i32, %arg1: i32) -> (i32, i32, i32) {
    %c0_i32 = arith.constant 0 : i32
    %c0_i32_0 = arith.constant 0 : i32
    return %arg0, %arg1, %c0_i32 : i32, i32, i32
  }
  func.func @transform_11(%arg0: i32, %arg1: i32) -> (i32, i32, i32) {
    %c0_i32 = arith.constant 0 : i32
    %c0_i32_0 = arith.constant 0 : i32
    return %arg0, %arg1, %c0_i32 : i32, i32, i32
  }
}

</mosaic_0001>

<llo_original>
// kernel: tpu_custom_call.1
$region0: #{tpu_custom_call.1}
  #allocation0 [shape = 'u32[]', space=smem, size = 0x4, offset = 0x4, fixed_abs, tag = 'smem constant byte address 0x4 - core index']
  #allocation1 [shape = 'u32[72,128]{1,0:T(1,128)}', space=vmem, size = 0x9000, scoped, tag = 'internal scratch']
  %s0 = inlined_call_operand.vmem [shape: f32[2,256,64], index: 0, kind: input, shape index: {}]
  %s1 = inlined_call_operand.vmem [shape: f32[2,1,64], index: 1, kind: input, shape index: {}]
  %s2 = inlined_call_operand.vmem [shape: f32[2,1,64], index: 2, kind: input, shape index: {}]
  %s3 = inlined_call_operand.vmem [shape: bf16[64,64], index: 3, kind: input, shape index: {}]
  %s4 = inlined_call_operand.vmem [shape: bf16[64,64], index: 4, kind: input, shape index: {}]
  %s5 = inlined_call_operand.vmem [shape: bf16[64,64], index: 5, kind: input, shape index: {}]
  %s6 = inlined_call_operand.vmem [shape: f32[1,64], index: 6, kind: input, shape index: {}]
  %s7 = inlined_call_operand.vmem [shape: f32[1,64], index: 7, kind: input, shape index: {}]
  %s8 = inlined_call_operand.vmem [shape: f32[1,64], index: 8, kind: input, shape index: {}]
  %s9 = inlined_call_operand.vmem [shape: bf16[2,256,64], index: 9, kind: output, shape index: {0}]
  %s10 = inlined_call_operand.vmem [shape: bf16[2,256,64], index: 10, kind: output, shape index: {1}]
  %s11 = inlined_call_operand.vmem [shape: bf16[2,256,64], index: 11, kind: output, shape index: {2}]
  %12 = xla_tuple %s9, %s10, %s11
  %s13 = sld [smem:[#allocation0]]
  $region85: #{tpu_custom_call.1} parent=0
    _
  %s15 = ssub.s32 1, %s13
  %s16 = scalar_select 0, %s15, %s13
  loop: start=0, step=1, limit=4
  $region2: #{tpu_custom_call.1} parent=0 // loop_pre_header
    _
  $region3: #{tpu_custom_call.1} parent=0 // loop_header
    %s18 = sphi 0, %s22
    %p19 = scmp.ge.s32.totalorder %s18, 4
    %s25 = sphi 0, %s37
    %s26 = sphi 0, %s33
    %s27 = sphi 0, %s25
    %s28 = sphi 0, %s26
    %s29 = sphi 0, %s27
    %s30 = sphi 0, %s28
    %s42 = sphi 0, %s44
    %s45 = sphi 0, %s42
    %s46 = sphi 0, %s45
    %s62 = sphi 0, %s46
    %s68 = sphi 0, %s70
    %s71 = sphi 0, %s68
    %s72 = sphi 0, %s71
    %s88 = sphi 0, %s72
    %s94 = sphi 0, %s96
    %s97 = sphi 0, %s94
    %s98 = sphi 0, %s97
    %s114 = sphi 0, %s98
    %s118 = sphi 0, %s118
    %s120 = sphi 0, %s118
    %s121 = sphi 0, %s120
    %s135 = sphi 0, %s121
    %s139 = sphi 0, %s139
    %s141 = sphi 0, %s139
    %s142 = sphi 0, %s141
    %s156 = sphi 0, %s142
    %s160 = sphi 0, %s160
    %s162 = sphi 0, %s160
    %s163 = sphi 0, %s162
    %s177 = sphi 0, %s163
    %s181 = sphi 0, %s181
    %s183 = sphi 0, %s181
    %s184 = sphi 0, %s183
    %s198 = sphi 0, %s184
    %s202 = sphi 0, %s202
    %s204 = sphi 0, %s202
    %s205 = sphi 0, %s204
    %s219 = sphi 0, %s205
    %s223 = sphi 0, %s223
    %s225 = sphi 0, %s223
    %s226 = sphi 0, %s225
    %s240 = sphi 0, %s226
    %s248 = sphi 0, %s250
    %s251 = sphi 0, %s248
    %s252 = sphi 0, %s251
    %s268 = sphi 0, %s252
    %s276 = sphi 0, %s278
    %s279 = sphi 0, %s276
    %s280 = sphi 0, %s279
    %s296 = sphi 0, %s280
    %s304 = sphi 0, %s306
    %s307 = sphi 0, %s304
    %s308 = sphi 0, %s307
    %s324 = sphi 0, %s308
  $region4: #{tpu_custom_call.1} parent=0 // loop_header_branch
    %21 = sbr.rel (%p19) target = $region8
  $region5: #{tpu_custom_call.1} parent=0 // loop_body
    %s23 = ssub.s32 %s18, 1
    %s24 = ssub.s32 %s18, 2
    %s31 = sadd.s32 1, %s26
    %p32 = scmp.ge.s32.totalorder %s31, 1
    %s33 = scalar_select %p32, 0, %s31
    %s34 = sadd.s32 1, %s25
    %s35 = scalar_select %p32, %s34, %s25
    %p36 = scmp.ge.s32.totalorder %s35, 2
    %s37 = scalar_select %p36, 0, %s35
    %s38 = ssub.s32 %s25, %s37
    %s39 = ssub.s32 %s26, %s33
    %s40 = sor.u32 %s38, %s39
    %p41 = scmp.eq.s32.totalorder %s40, 0
    %s43 = sadd.s32 %s42, 1
    %s44 = scalar_select %p41, %s42, %s43
    %p47 = pneg %p41
    %p48 = scmp.eq.s32.totalorder %s18, 1
    %p49 = por %p47, %p48
    %p50 = scmp.ne.s32.totalorder %s42, %s45
    %p51 = scmp.eq.s32.totalorder %s18, 0
    %p52 = por %p50, %p51
    %p53 = scmp.ne.s32.totalorder %s42, %s45
    %p54 = scmp.eq.s32.totalorder %s23, 1
    %p55 = por %p53, %p54
    %p56 = scmp.ne.s32.totalorder %s45, %s46
    %p57 = scmp.eq.s32.totalorder %s23, 0
    %p58 = por %p56, %p57
    %p59 = scmp.ne.s32.totalorder %s45, %s46
    %p60 = scmp.eq.s32.totalorder %s24, 1
    %p61 = por %p59, %p60
    %p63 = scmp.ne.s32.totalorder %s46, %s62
    %p64 = scmp.eq.s32.totalorder %s24, 0
    %p65 = por %p63, %p64
    %s66 = ssub.s32 %s25, %s37
    %p67 = scmp.eq.s32.totalorder %s66, 0
    %s69 = sadd.s32 %s68, 1
    %s70 = scalar_select %p67, %s68, %s69
    %p73 = pneg %p67
    %p74 = scmp.eq.s32.totalorder %s18, 1
    %p75 = por %p73, %p74
    %p76 = scmp.ne.s32.totalorder %s68, %s71
    %p77 = scmp.eq.s32.totalorder %s18, 0
    %p78 = por %p76, %p77
    %p79 = scmp.ne.s32.totalorder %s68, %s71
    %p80 = scmp.eq.s32.totalorder %s23, 1
    %p81 = por %p79, %p80
    %p82 = scmp.ne.s32.totalorder %s71, %s72
    %p83 = scmp.eq.s32.totalorder %s23, 0
    %p84 = por %p82, %p83
    %p85 = scmp.ne.s32.totalorder %s71, %s72
    %p86 = scmp.eq.s32.totalorder %s24, 1
    %p87 = por %p85, %p86
    %p89 = scmp.ne.s32.totalorder %s72, %s88
    %p90 = scmp.eq.s32.totalorder %s24, 0
    %p91 = por %p89, %p90
    %s92 = ssub.s32 %s25, %s37
    %p93 = scmp.eq.s32.totalorder %s92, 0
    %s95 = sadd.s32 %s94, 1
    %s96 = scalar_select %p93, %s94, %s95
    %p99 = pneg %p93
    %p100 = scmp.eq.s32.totalorder %s18, 1
    %p101 = por %p99, %p100
    %p102 = scmp.ne.s32.totalorder %s94, %s97
    %p103 = scmp.eq.s32.totalorder %s18, 0
    %p104 = por %p102, %p103
    %p105 = scmp.ne.s32.totalorder %s94, %s97
    %p106 = scmp.eq.s32.totalorder %s23, 1
    %p107 = por %p105, %p106
    %p108 = scmp.ne.s32.totalorder %s97, %s98
    %p109 = scmp.eq.s32.totalorder %s23, 0
    %p110 = por %p108, %p109
    %p111 = scmp.ne.s32.totalorder %s97, %s98
    %p112 = scmp.eq.s32.totalorder %s24, 1
    %p113 = por %p111, %p112
    %p115 = scmp.ne.s32.totalorder %s98, %s114
    %p116 = scmp.eq.s32.totalorder %s24, 0
    %p117 = por %p115, %p116
    %s119 = sadd.s32 %s118, 1
    %p122 = scmp.eq.s32.totalorder %s18, 1
    %p123 = scmp.ne.s32.totalorder %s118, %s120
    %p124 = scmp.eq.s32.totalorder %s18, 0
    %p125 = por %p123, %p124
    %p126 = scmp.ne.s32.totalorder %s118, %s120
    %p127 = scmp.eq.s32.totalorder %s23, 1
    %p128 = por %p126, %p127
    %p129 = scmp.ne.s32.totalorder %s120, %s121
    %p130 = scmp.eq.s32.totalorder %s23, 0
    %p131 = por %p129, %p130
    %p132 = scmp.ne.s32.totalorder %s120, %s121
    %p133 = scmp.eq.s32.totalorder %s24, 1
    %p134 = por %p132, %p133
    %p136 = scmp.ne.s32.totalorder %s121, %s135
    %p137 = scmp.eq.s32.totalorder %s24, 0
    %p138 = por %p136, %p137
    %s140 = sadd.s32 %s139, 1
    %p143 = scmp.eq.s32.totalorder %s18, 1
    %p144 = scmp.ne.s32.totalorder %s139, %s141
    %p145 = scmp.eq.s32.totalorder %s18, 0
    %p146 = por %p144, %p145
    %p147 = scmp.ne.s32.totalorder %s139, %s141
    %p148 = scmp.eq.s32.totalorder %s23, 1
    %p149 = por %p147, %p148
    %p150 = scmp.ne.s32.totalorder %s141, %s142
    %p151 = scmp.eq.s32.totalorder %s23, 0
    %p152 = por %p150, %p151
    %p153 = scmp.ne.s32.totalorder %s141, %s142
    %p154 = scmp.eq.s32.totalorder %s24, 1
    %p155 = por %p153, %p154
    %p157 = scmp.ne.s32.totalorder %s142, %s156
    %p158 = scmp.eq.s32.totalorder %s24, 0
    %p159 = por %p157, %p158
    %s161 = sadd.s32 %s160, 1
    %p164 = scmp.eq.s32.totalorder %s18, 1
    %p165 = scmp.ne.s32.totalorder %s160, %s162
    %p166 = scmp.eq.s32.totalorder %s18, 0
    %p167 = por %p165, %p166
    %p168 = scmp.ne.s32.totalorder %s160, %s162
    %p169 = scmp.eq.s32.totalorder %s23, 1
    %p170 = por %p168, %p169
    %p171 = scmp.ne.s32.totalorder %s162, %s163
    %p172 = scmp.eq.s32.totalorder %s23, 0
    %p173 = por %p171, %p172
    %p174 = scmp.ne.s32.totalorder %s162, %s163
    %p175 = scmp.eq.s32.totalorder %s24, 1
    %p176 = por %p174, %p175
    %p178 = scmp.ne.s32.totalorder %s163, %s177
    %p179 = scmp.eq.s32.totalorder %s24, 0
    %p180 = por %p178, %p179
    %s182 = sadd.s32 %s181, 1
    %p185 = scmp.eq.s32.totalorder %s18, 1
    %p186 = scmp.ne.s32.totalorder %s181, %s183
    %p187 = scmp.eq.s32.totalorder %s18, 0
    %p188 = por %p186, %p187
    %p189 = scmp.ne.s32.totalorder %s181, %s183
    %p190 = scmp.eq.s32.totalorder %s23, 1
    %p191 = por %p189, %p190
    %p192 = scmp.ne.s32.totalorder %s183, %s184
    %p193 = scmp.eq.s32.totalorder %s23, 0
    %p194 = por %p192, %p193
    %p195 = scmp.ne.s32.totalorder %s183, %s184
    %p196 = scmp.eq.s32.totalorder %s24, 1
    %p197 = por %p195, %p196
    %p199 = scmp.ne.s32.totalorder %s184, %s198
    %p200 = scmp.eq.s32.totalorder %s24, 0
    %p201 = por %p199, %p200
    %s203 = sadd.s32 %s202, 1
    %p206 = scmp.eq.s32.totalorder %s18, 1
    %p207 = scmp.ne.s32.totalorder %s202, %s204
    %p208 = scmp.eq.s32.totalorder %s18, 0
    %p209 = por %p207, %p208
    %p210 = scmp.ne.s32.totalorder %s202, %s204
    %p211 = scmp.eq.s32.totalorder %s23, 1
    %p212 = por %p210, %p211
    %p213 = scmp.ne.s32.totalorder %s204, %s205
    %p214 = scmp.eq.s32.totalorder %s23, 0
    %p215 = por %p213, %p214
    %p216 = scmp.ne.s32.totalorder %s204, %s205
    %p217 = scmp.eq.s32.totalorder %s24, 1
    %p218 = por %p216, %p217
    %p220 = scmp.ne.s32.totalorder %s205, %s219
    %p221 = scmp.eq.s32.totalorder %s24, 0
    %p222 = por %p220, %p221
    %s224 = sadd.s32 %s223, 1
    %p227 = scmp.eq.s32.totalorder %s18, 1
    %p228 = scmp.ne.s32.totalorder %s223, %s225
    %p229 = scmp.eq.s32.totalorder %s18, 0
    %p230 = por %p228, %p229
    %p231 = scmp.ne.s32.totalorder %s223, %s225
    %p232 = scmp.eq.s32.totalorder %s23, 1
    %p233 = por %p231, %p232
    %p234 = scmp.ne.s32.totalorder %s225, %s226
    %p235 = scmp.eq.s32.totalorder %s23, 0
    %p236 = por %p234, %p235
    %p237 = scmp.ne.s32.totalorder %s225, %s226
    %p238 = scmp.eq.s32.totalorder %s24, 1
    %p239 = por %p237, %p238
    %p241 = scmp.ne.s32.totalorder %s226, %s240
    %p242 = scmp.eq.s32.totalorder %s24, 0
    %p243 = por %p241, %p242
    %s244 = ssub.s32 %s25, %s37
    %s245 = ssub.s32 %s26, %s33
    %s246 = sor.u32 %s244, %s245
    %p247 = scmp.eq.s32.totalorder %s246, 0
    %s249 = sadd.s32 %s248, 1
    %s250 = scalar_select %p247, %s248, %s249
    %p253 = pneg %p247
    %p254 = scmp.eq.s32.totalorder %s18, 1
    %p255 = por %p253, %p254
    %p256 = scmp.ne.s32.totalorder %s248, %s251
    %p257 = scmp.eq.s32.totalorder %s18, 0
    %p258 = por %p256, %p257
    %p259 = scmp.ne.s32.totalorder %s248, %s251
    %p260 = scmp.eq.s32.totalorder %s23, 1
    %p261 = por %p259, %p260
    %p262 = scmp.ne.s32.totalorder %s251, %s252
    %p263 = scmp.eq.s32.totalorder %s23, 0
    %p264 = por %p262, %p263
    %p265 = scmp.ne.s32.totalorder %s251, %s252
    %p266 = scmp.eq.s32.totalorder %s24, 1
    %p267 = por %p265, %p266
    %p269 = scmp.ne.s32.totalorder %s252, %s268
    %p270 = scmp.eq.s32.totalorder %s24, 0
    %p271 = por %p269, %p270
    %s272 = ssub.s32 %s25, %s37
    %s273 = ssub.s32 %s26, %s33
    %s274 = sor.u32 %s272, %s273
    %p275 = scmp.eq.s32.totalorder %s274, 0
    %s277 = sadd.s32 %s276, 1
    %s278 = scalar_select %p275, %s276, %s277
    %p281 = pneg %p275
    %p282 = scmp.eq.s32.totalorder %s18, 1
    %p283 = por %p281, %p282
    %p284 = scmp.ne.s32.totalorder %s276, %s279
    %p285 = scmp.eq.s32.totalorder %s18, 0
    %p286 = por %p284, %p285
    %p287 = scmp.ne.s32.totalorder %s276, %s279
    %p288 = scmp.eq.s32.totalorder %s23, 1
    %p289 = por %p287, %p288
    %p290 = scmp.ne.s32.totalorder %s279, %s280
    %p291 = scmp.eq.s32.totalorder %s23, 0
    %p292 = por %p290, %p291
    %p293 = scmp.ne.s32.totalorder %s279, %s280
    %p294 = scmp.eq.s32.totalorder %s24, 1
    %p295 = por %p293, %p294
    %p297 = scmp.ne.s32.totalorder %s280, %s296
    %p298 = scmp.eq.s32.totalorder %s24, 0
    %p299 = por %p297, %p298
    %s300 = ssub.s32 %s25, %s37
    %s301 = ssub.s32 %s26, %s33
    %s302 = sor.u32 %s300, %s301
    %p303 = scmp.eq.s32.totalorder %s302, 0
    %s305 = sadd.s32 %s304, 1
    %s306 = scalar_select %p303, %s304, %s305
    %p309 = pneg %p303
    %p310 = scmp.eq.s32.totalorder %s18, 1
    %p311 = por %p309, %p310
    %p312 = scmp.ne.s32.totalorder %s304, %s307
    %p313 = scmp.eq.s32.totalorder %s18, 0
    %p314 = por %p312, %p313
    %p315 = scmp.ne.s32.totalorder %s304, %s307
    %p316 = scmp.eq.s32.totalorder %s23, 1
    %p317 = por %p315, %p316
    %p318 = scmp.ne.s32.totalorder %s307, %s308
    %p319 = scmp.eq.s32.totalorder %s23, 0
    %p320 = por %p318, %p319
    %p321 = scmp.ne.s32.totalorder %s307, %s308
    %p322 = scmp.eq.s32.totalorder %s24, 1
    %p323 = por %p321, %p322
    %p325 = scmp.ne.s32.totalorder %s308, %s324
    %p326 = scmp.eq.s32.totalorder %s24, 0
    %p327 = por %p325, %p326
    %p328 = scmp.le.s32.totalorder 1, %s18
    %p329 = scmp.lt.s32.totalorder %s18, 3
    %p330 = pnand %p328, %p329
    %p331 = pneg %p330
    // Predicated region
    $region9: #{tpu_custom_call.1} parent=5 // pred_check
      _
    $region10: #{tpu_custom_call.1} parent=5 // pred_check_branch
      %333 = sbr.rel (%p330) target = $region12
    $region11: #{tpu_custom_call.1} parent=5 // pred_region
      %s334 = ssub.s32 %s18, 1
      // Predicated region
      $region13: #{tpu_custom_call.1} parent=11 // pred_check
        %p335 = pneg %p131
      $region14: #{tpu_custom_call.1} parent=11 // pred_check_branch
        %337 = sbr.rel (%p335) target = $region16
      $region15: #{tpu_custom_call.1} parent=11 // pred_region
        _
      $region16: #{tpu_custom_call.1} parent=11 // pred_fallthru
        _
      // Predicated region
      $region17: #{tpu_custom_call.1} parent=11 // pred_check
        %p338 = pneg %p152
      $region18: #{tpu_custom_call.1} parent=11 // pred_check_branch
        %340 = sbr.rel (%p338) target = $region20
      $region19: #{tpu_custom_call.1} parent=11 // pred_region
        _
      $region20: #{tpu_custom_call.1} parent=11 // pred_fallthru
        _
      // Predicated region
      $region21: #{tpu_custom_call.1} parent=11 // pred_check
        %p341 = pneg %p173
      $region22: #{tpu_custom_call.1} parent=11 // pred_check_branch
        %343 = sbr.rel (%p341) target = $region24
      $region23: #{tpu_custom_call.1} parent=11 // pred_region
        _
      $region24: #{tpu_custom_call.1} parent=11 // pred_fallthru
        _
      // Predicated region
      $region25: #{tpu_custom_call.1} parent=11 // pred_check
        %p344 = pneg %p194
      $region26: #{tpu_custom_call.1} parent=11 // pred_check_branch
        %346 = sbr.rel (%p344) target = $region28
      $region27: #{tpu_custom_call.1} parent=11 // pred_region
        _
      $region28: #{tpu_custom_call.1} parent=11 // pred_fallthru
        _
      // Predicated region
      $region29: #{tpu_custom_call.1} parent=11 // pred_check
        %p347 = pneg %p215
      $region30: #{tpu_custom_call.1} parent=11 // pred_check_branch
        %349 = sbr.rel (%p347) target = $region32
      $region31: #{tpu_custom_call.1} parent=11 // pred_region
        _
      $region32: #{tpu_custom_call.1} parent=11 // pred_fallthru
        _
      // Predicated region
      $region33: #{tpu_custom_call.1} parent=11 // pred_check
        %p350 = pneg %p236
      $region34: #{tpu_custom_call.1} parent=11 // pred_check_branch
        %352 = sbr.rel (%p350) target = $region36
      $region35: #{tpu_custom_call.1} parent=11 // pred_region
        _
      $region36: #{tpu_custom_call.1} parent=11 // pred_fallthru
        _
    $region12: #{tpu_custom_call.1} parent=5 // pred_fallthru
      _
    %p353 = scmp.lt.s32.totalorder %s18, 2
    // Predicated region
    $region37: #{tpu_custom_call.1} parent=5 // pred_check
      %p354 = pneg %p353
    $region38: #{tpu_custom_call.1} parent=5 // pred_check_branch
      %356 = sbr.rel (%p354) target = $region40
    $region39: #{tpu_custom_call.1} parent=5 // pred_region
      // Predicated region
      $region41: #{tpu_custom_call.1} parent=39 // pred_check
        %p357 = pneg %p52
      $region42: #{tpu_custom_call.1} parent=39 // pred_check_branch
        %359 = sbr.rel (%p357) target = $region44
      $region43: #{tpu_custom_call.1} parent=39 // pred_region
        %s360 = smul.u32 32, %s26
        %p361 = scmp.lt.s32.totalorder %s25, 1
        %s362 = scalar_select %p361, %s25, 1
        %p363 = scmp.lt.s32.totalorder %s360, 31
        %s364 = scalar_select %p363, %s360, 31
        %s365 = smul.addr %s362, 32
        %s366 = sadd.s32 %s364, %s365
        %s367 = smul.addr %s366, 8
        %s368 = scalar_lea.vmem %s0, %s367
        %s369 = smul.u32 32, %s26
      $region44: #{tpu_custom_call.1} parent=39 // pred_fallthru
        _
      // Predicated region
      $region45: #{tpu_custom_call.1} parent=39 // pred_check
        %p370 = pneg %p78
      $region46: #{tpu_custom_call.1} parent=39 // pred_check_branch
        %372 = sbr.rel (%p370) target = $region48
      $region47: #{tpu_custom_call.1} parent=39 // pred_region
        %p373 = scmp.lt.s32.totalorder %s25, 1
        %s374 = scalar_select %p373, %s25, 1
        %s375 = scalar_lea.vmem %s1, %s374
      $region48: #{tpu_custom_call.1} parent=39 // pred_fallthru
        _
      // Predicated region
      $region49: #{tpu_custom_call.1} parent=39 // pred_check
        %p376 = pneg %p104
      $region50: #{tpu_custom_call.1} parent=39 // pred_check_branch
        %378 = sbr.rel (%p376) target = $region52
      $region51: #{tpu_custom_call.1} parent=39 // pred_region
        %p379 = scmp.lt.s32.totalorder %s25, 1
        %s380 = scalar_select %p379, %s25, 1
        %s381 = scalar_lea.vmem %s2, %s380
      $region52: #{tpu_custom_call.1} parent=39 // pred_fallthru
        _
    $region40: #{tpu_custom_call.1} parent=5 // pred_fallthru
      _
    %p382 = scmp.le.s32.totalorder 1, %s18
    %p383 = scmp.lt.s32.totalorder %s18, 3
    %p384 = pnand %p382, %p383
    %p385 = pneg %p384
    // Predicated region
    $region53: #{tpu_custom_call.1} parent=5 // pred_check
      _
    $region54: #{tpu_custom_call.1} parent=5 // pred_check_branch
      %387 = sbr.rel (%p384) target = $region56
    $region55: #{tpu_custom_call.1} parent=5 // pred_region
      %s388 = ssub.s32 %s18, 1
      %s389 = smul.u32 32, %s28
      %p390 = scmp.lt.s32.totalorder %s27, 1
      %s391 = scalar_select %p390, %s27, 1
      %p392 = scmp.lt.s32.totalorder %s389, 31
      %s393 = scalar_select %p392, %s389, 31
      %s394 = smul.addr %s391, 32
      %s395 = sadd.s32 %s393, %s394
      %s396 = smul.addr %s395, 8
      %s397 = scalar_lea.vmem %s0, %s396
      %p398 = pneg %p58
      %p399 = pneg %p55
      %p400 = scmp.lt.s32.totalorder %s27, 1
      %s401 = scalar_select %p400, %s27, 1
      %s402 = scalar_lea.vmem %s1, %s401
      %p403 = pneg %p84
      %p404 = pneg %p81
      %p405 = scmp.lt.s32.totalorder %s27, 1
      %s406 = scalar_select %p405, %s27, 1
      %s407 = scalar_lea.vmem %s2, %s406
      %p408 = pneg %p110
      %p409 = pneg %p107
      %p410 = pneg %p131
      %p411 = pneg %p128
      %p412 = pneg %p152
      %p413 = pneg %p149
      %p414 = pneg %p173
      %p415 = pneg %p170
      %p416 = pneg %p194
      %p417 = pneg %p191
      %p418 = pneg %p215
      %p419 = pneg %p212
      %p420 = pneg %p236
      %p421 = pneg %p233
      %p422 = pneg %p264
      %p423 = pneg %p261
      %s424 = smul.u32 32, %s28
      %p425 = scmp.lt.s32.totalorder %s27, 1
      %s426 = scalar_select %p425, %s27, 1
      %p427 = scmp.lt.s32.totalorder %s424, 31
      %s428 = scalar_select %p427, %s424, 31
      %s429 = smul.addr %s426, 32
      %s430 = sadd.s32 %s428, %s429
      %s431 = smul.addr %s430, 4
      %s432 = scalar_lea.vmem %s9, %s431
      %p433 = pneg %p292
      %p434 = pneg %p289
      %s435 = smul.u32 32, %s28
      %p436 = scmp.lt.s32.totalorder %s27, 1
      %s437 = scalar_select %p436, %s27, 1
      %p438 = scmp.lt.s32.totalorder %s435, 31
      %s439 = scalar_select %p438, %s435, 31
      %s440 = smul.addr %s437, 32
      %s441 = sadd.s32 %s439, %s440
      %s442 = smul.addr %s441, 4
      %s443 = scalar_lea.vmem %s10, %s442
      %p444 = pneg %p320
      %p445 = pneg %p317
      %s446 = smul.u32 32, %s28
      %p447 = scmp.lt.s32.totalorder %s27, 1
      %s448 = scalar_select %p447, %s27, 1
      %p449 = scmp.lt.s32.totalorder %s446, 31
      %s450 = scalar_select %p449, %s446, 31
      %s451 = smul.addr %s448, 32
      %s452 = sadd.s32 %s450, %s451
      %s453 = smul.addr %s452, 4
      %s454 = scalar_lea.vmem %s11, %s453
      %s455 = smul.u32 32, %s28
      %p456 = scmp.lt.s32.totalorder %s27, 1
      %s457 = scalar_select %p456, %s27, 1
      %p458 = scmp.lt.s32.totalorder %s455, 31
      %s459 = scalar_select %p458, %s455, 31
      %s460 = smul.addr %s457, 32
      %s461 = sadd.s32 %s459, %s460
      %s462 = smul.addr %s461, 8
      %s463 = scalar_lea.vmem %s0, %s462
      %s464 = smul.u32 32, %s28
      %p465 = scmp.lt.s32.totalorder %s27, 1
      %s466 = scalar_select %p465, %s27, 1
      %s467 = scalar_lea.vmem %s1, %s466
      %p468 = scmp.lt.s32.totalorder %s27, 1
      %s469 = scalar_select %p468, %s27, 1
      %s470 = scalar_lea.vmem %s2, %s469
      %s471 = smul.u32 32, %s28
      %p472 = scmp.lt.s32.totalorder %s27, 1
      %s473 = scalar_select %p472, %s27, 1
      %p474 = scmp.lt.s32.totalorder %s471, 31
      %s475 = scalar_select %p474, %s471, 31
      %s476 = smul.addr %s473, 32
      %s477 = sadd.s32 %s475, %s476
      %s478 = smul.addr %s477, 4
      %s479 = scalar_lea.vmem %s9, %s478
      %s480 = smul.u32 32, %s28
      %s481 = smul.u32 32, %s28
      %p482 = scmp.lt.s32.totalorder %s27, 1
      %s483 = scalar_select %p482, %s27, 1
      %p484 = scmp.lt.s32.totalorder %s481, 31
      %s485 = scalar_select %p484, %s481, 31
      %s486 = smul.addr %s483, 32
      %s487 = sadd.s32 %s485, %s486
      %s488 = smul.addr %s487, 4
      %s489 = scalar_lea.vmem %s10, %s488
      %s490 = smul.u32 32, %s28
      %s491 = smul.u32 32, %s28
      %p492 = scmp.lt.s32.totalorder %s27, 1
      %s493 = scalar_select %p492, %s27, 1
      %p494 = scmp.lt.s32.totalorder %s491, 31
      %s495 = scalar_select %p494, %s491, 31
      %s496 = smul.addr %s493, 32
      %s497 = sadd.s32 %s495, %s496
      %s498 = smul.addr %s497, 4
      %s499 = scalar_lea.vmem %s11, %s498
      %s500 = smul.u32 32, %s28
      %v502 = vld [vmem:[%s463] sm:$0xff]
      %v503 = vld [vmem:[%s463 + $0x8] sm:$0xff]
      %v504 = vld [vmem:[%s463 + $0x10] sm:$0xff]
      %v505 = vld [vmem:[%s463 + $0x18] sm:$0xff]
      %v506 = vld [vmem:[%s463 + $0x20] sm:$0xff]
      %v507 = vld [vmem:[%s463 + $0x28] sm:$0xff]
      %v508 = vld [vmem:[%s463 + $0x30] sm:$0xff]
      %v509 = vld [vmem:[%s463 + $0x38] sm:$0xff]
      %v510 = vld [vmem:[%s463 + $0x40] sm:$0xff]
      %v511 = vld [vmem:[%s463 + $0x48] sm:$0xff]
      %v512 = vld [vmem:[%s463 + $0x50] sm:$0xff]
      %v513 = vld [vmem:[%s463 + $0x58] sm:$0xff]
      %v514 = vld [vmem:[%s463 + $0x60] sm:$0xff]
      %v515 = vld [vmem:[%s463 + $0x68] sm:$0xff]
      %v516 = vld [vmem:[%s463 + $0x70] sm:$0xff]
      %v517 = vld [vmem:[%s463 + $0x78] sm:$0xff]
      %v518 = vld [vmem:[%s463 + $0x80] sm:$0xff]
      %v519 = vld [vmem:[%s463 + $0x88] sm:$0xff]
      %v520 = vld [vmem:[%s463 + $0x90] sm:$0xff]
      %v521 = vld [vmem:[%s463 + $0x98] sm:$0xff]
      %v522 = vld [vmem:[%s463 + $0xa0] sm:$0xff]
      %v523 = vld [vmem:[%s463 + $0xa8] sm:$0xff]
      %v524 = vld [vmem:[%s463 + $0xb0] sm:$0xff]
      %v525 = vld [vmem:[%s463 + $0xb8] sm:$0xff]
      %v526 = vld [vmem:[%s463 + $0xc0] sm:$0xff]
      %v527 = vld [vmem:[%s463 + $0xc8] sm:$0xff]
      %v528 = vld [vmem:[%s463 + $0xd0] sm:$0xff]
      %v529 = vld [vmem:[%s463 + $0xd8] sm:$0xff]
      %v530 = vld [vmem:[%s463 + $0xe0] sm:$0xff]
      %v531 = vld [vmem:[%s463 + $0xe8] sm:$0xff]
      %v532 = vld [vmem:[%s463 + $0xf0] sm:$0xff]
      %v533 = vld [vmem:[%s463 + $0xf8] sm:$0xff]
      %v534 = vld [vmem:[%s467] sm:$0x1]
      %v536 = vperm.slane %v534, 0
      %v538 = vmul.f32 %v502, %v536
      %v539 = vmul.f32 %v503, %v536
      %v540 = vmul.f32 %v504, %v536
      %v541 = vmul.f32 %v505, %v536
      %v542 = vmul.f32 %v506, %v536
      %v543 = vmul.f32 %v507, %v536
      %v544 = vmul.f32 %v508, %v536
      %v545 = vmul.f32 %v509, %v536
      %v546 = vmul.f32 %v510, %v536
      %v547 = vmul.f32 %v511, %v536
      %v548 = vmul.f32 %v512, %v536
      %v549 = vmul.f32 %v513, %v536
      %v550 = vmul.f32 %v514, %v536
      %v551 = vmul.f32 %v515, %v536
      %v552 = vmul.f32 %v516, %v536
      %v553 = vmul.f32 %v517, %v536
      %v554 = vmul.f32 %v518, %v536
      %v555 = vmul.f32 %v519, %v536
      %v556 = vmul.f32 %v520, %v536
      %v557 = vmul.f32 %v521, %v536
      %v558 = vmul.f32 %v522, %v536
      %v559 = vmul.f32 %v523, %v536
      %v560 = vmul.f32 %v524, %v536
      %v561 = vmul.f32 %v525, %v536
      %v562 = vmul.f32 %v526, %v536
      %v563 = vmul.f32 %v527, %v536
      %v564 = vmul.f32 %v528, %v536
      %v565 = vmul.f32 %v529, %v536
      %v566 = vmul.f32 %v530, %v536
      %v567 = vmul.f32 %v531, %v536
      %v568 = vmul.f32 %v532, %v536
      %v569 = vmul.f32 %v533, %v536
      %v570 = vld [vmem:[%s470] sm:$0x1]
      %v572 = vperm.slane %v570, 0
      %v574 = vadd.f32 %v538, %v572
      %v575 = vadd.f32 %v539, %v572
      %v576 = vadd.f32 %v540, %v572
      %v577 = vadd.f32 %v541, %v572
      %v578 = vadd.f32 %v542, %v572
      %v579 = vadd.f32 %v543, %v572
      %v580 = vadd.f32 %v544, %v572
      %v581 = vadd.f32 %v545, %v572
      %v582 = vadd.f32 %v546, %v572
      %v583 = vadd.f32 %v547, %v572
      %v584 = vadd.f32 %v548, %v572
      %v585 = vadd.f32 %v549, %v572
      %v586 = vadd.f32 %v550, %v572
      %v587 = vadd.f32 %v551, %v572
      %v588 = vadd.f32 %v552, %v572
      %v589 = vadd.f32 %v553, %v572
      %v590 = vadd.f32 %v554, %v572
      %v591 = vadd.f32 %v555, %v572
      %v592 = vadd.f32 %v556, %v572
      %v593 = vadd.f32 %v557, %v572
      %v594 = vadd.f32 %v558, %v572
      %v595 = vadd.f32 %v559, %v572
      %v596 = vadd.f32 %v560, %v572
      %v597 = vadd.f32 %v561, %v572
      %v598 = vadd.f32 %v562, %v572
      %v599 = vadd.f32 %v563, %v572
      %v600 = vadd.f32 %v564, %v572
      %v601 = vadd.f32 %v565, %v572
      %v602 = vadd.f32 %v566, %v572
      %v603 = vadd.f32 %v567, %v572
      %v604 = vadd.f32 %v568, %v572
      %v605 = vadd.f32 %v569, %v572
      %v606 = vpack.c.bf16 %v575, %v574
      %v607 = vpack.c.bf16 %v577, %v576
      %v608 = vpack.c.bf16 %v579, %v578
      %v609 = vpack.c.bf16 %v581, %v580
      %v610 = vpack.c.bf16 %v583, %v582
      %v611 = vpack.c.bf16 %v585, %v584
      %v612 = vpack.c.bf16 %v587, %v586
      %v613 = vpack.c.bf16 %v589, %v588
      %v614 = vpack.c.bf16 %v591, %v590
      %v615 = vpack.c.bf16 %v593, %v592
      %v616 = vpack.c.bf16 %v595, %v594
      %v617 = vpack.c.bf16 %v597, %v596
      %v618 = vpack.c.bf16 %v599, %v598
      %v619 = vpack.c.bf16 %v601, %v600
      %v620 = vpack.c.bf16 %v603, %v602
      %v621 = vpack.c.bf16 %v605, %v604
      %v622 = vld [vmem:[%s3] sm:$0xf]
      %v623 = vld [vmem:[%s3 + $0x4] sm:$0xf]
      %v624 = vld [vmem:[%s3 + $0x8] sm:$0xf]
      %v625 = vld [vmem:[%s3 + $0xc] sm:$0xf]
      %v626 = vld [vmem:[%s3 + $0x10] sm:$0xf]
      %v627 = vld [vmem:[%s3 + $0x14] sm:$0xf]
      %v628 = vld [vmem:[%s3 + $0x18] sm:$0xf]
      %v629 = vld [vmem:[%s3 + $0x1c] sm:$0xf]
      %v630 = vld [vmem:[%s6] sm:$0x1]
      %v632 = vperm.slane %v630, 0
      %v642 = vunpack.c.l.b16 %v622
      %v643 = vunpack.c.l.b16 %v623
      %v644 = vunpack.c.l.b16 %v624
      %v645 = vunpack.c.l.b16 %v625
      %v646 = vunpack.c.l.b16 %v626
      %v647 = vunpack.c.l.b16 %v627
      %v648 = vunpack.c.l.b16 %v628
      %v649 = vunpack.c.l.b16 %v629
      %v650 = vpack.c.b16 %v643, %v642
      %v651 = vpack.c.b16 %v645, %v644
      %v652 = vpack.c.b16 %v647, %v646
      %v653 = vpack.c.b16 %v649, %v648
      %vm658 = vcmask 523264
      %v660 = vsel %vm658, %v606, 0
      %v663 = vsel %vm658, %v607, 0
      %v666 = vsel %vm658, %v608, 0
      %v669 = vsel %vm658, %v609, 0
      %v672 = vsel %vm658, %v610, 0
      %v675 = vsel %vm658, %v611, 0
      %v678 = vsel %vm658, %v612, 0
      %v681 = vsel %vm658, %v613, 0
      %v684 = vsel %vm658, %v614, 0
      %v687 = vsel %vm658, %v615, 0
      %v690 = vsel %vm658, %v616, 0
      %v693 = vsel %vm658, %v617, 0
      %v696 = vsel %vm658, %v618, 0
      %v699 = vsel %vm658, %v619, 0
      %v702 = vsel %vm658, %v620, 0
      %v705 = vsel %vm658, %v621, 0
      %707 = vmatpush.bf16.msra.mxu0 0
      %708 = vmatpush.bf16.msra.mxu0 0
      %709 = vmatpush.bf16.msra.mxu0 0
      %710 = vmatpush.bf16.msra.mxu0 0
      %711 = vmatpush.bf16.msra.mxu0 %v653
      %712 = vmatpush.bf16.msra.mxu0 %v652
      %713 = vmatpush.bf16.msra.mxu0 %v651
      %714 = vmatpush.bf16.msra.mxu0 %v650
      %715 = vmatmul.bf16.gmra.mxu0 %v660
      %v716 = vpop.f32.mrf.mxu0
      %v717 = vadd.f32 %v632, %v716
      %v718 = vpop.f32.mrf.mxu0
      %v719 = vadd.f32 %v632, %v718
      %720 = vmatmul.bf16.gmra.mxu0 %v663
      %v721 = vpop.f32.mrf.mxu0
      %v722 = vadd.f32 %v632, %v721
      %v723 = vpop.f32.mrf.mxu0
      %v724 = vadd.f32 %v632, %v723
      %725 = vmatmul.bf16.gmra.mxu0 %v666
      %v726 = vpop.f32.mrf.mxu0
      %v727 = vadd.f32 %v632, %v726
      %v728 = vpop.f32.mrf.mxu0
      %v729 = vadd.f32 %v632, %v728
      %730 = vmatmul.bf16.gmra.mxu0 %v669
      %v731 = vpop.f32.mrf.mxu0
      %v732 = vadd.f32 %v632, %v731
      %v733 = vpop.f32.mrf.mxu0
      %v734 = vadd.f32 %v632, %v733
      %735 = vmatmul.bf16.gmra.mxu0 %v672
      %v736 = vpop.f32.mrf.mxu0
      %v737 = vadd.f32 %v632, %v736
      %v738 = vpop.f32.mrf.mxu0
      %v739 = vadd.f32 %v632, %v738
      %740 = vmatmul.bf16.gmra.mxu0 %v675
      %v741 = vpop.f32.mrf.mxu0
      %v742 = vadd.f32 %v632, %v741
      %v743 = vpop.f32.mrf.mxu0
      %v744 = vadd.f32 %v632, %v743
      %745 = vmatmul.bf16.gmra.mxu0 %v678
      %v746 = vpop.f32.mrf.mxu0
      %v747 = vadd.f32 %v632, %v746
      %v748 = vpop.f32.mrf.mxu0
      %v749 = vadd.f32 %v632, %v748
      %750 = vmatmul.bf16.gmra.mxu0 %v681
      %v751 = vpop.f32.mrf.mxu0
      %v752 = vadd.f32 %v632, %v751
      %v753 = vpop.f32.mrf.mxu0
      %v754 = vadd.f32 %v632, %v753
      %755 = vmatmul.bf16.gmra.mxu0 %v684
      %v756 = vpop.f32.mrf.mxu0
      %v757 = vadd.f32 %v632, %v756
      %v758 = vpop.f32.mrf.mxu0
      %v759 = vadd.f32 %v632, %v758
      %760 = vmatmul.bf16.gmra.mxu0 %v687
      %v761 = vpop.f32.mrf.mxu0
      %v762 = vadd.f32 %v632, %v761
      %v763 = vpop.f32.mrf.mxu0
      %v764 = vadd.f32 %v632, %v763
      %765 = vmatmul.bf16.gmra.mxu0 %v690
      %v766 = vpop.f32.mrf.mxu0
      %v767 = vadd.f32 %v632, %v766
      %v768 = vpop.f32.mrf.mxu0
      %v769 = vadd.f32 %v632, %v768
      %770 = vmatmul.bf16.gmra.mxu0 %v693
      %v771 = vpop.f32.mrf.mxu0
      %v772 = vadd.f32 %v632, %v771
      %v773 = vpop.f32.mrf.mxu0
      %v774 = vadd.f32 %v632, %v773
      %775 = vmatmul.bf16.gmra.mxu0 %v696
      %v776 = vpop.f32.mrf.mxu0
      %v777 = vadd.f32 %v632, %v776
      %v778 = vpop.f32.mrf.mxu0
      %v779 = vadd.f32 %v632, %v778
      %780 = vmatmul.bf16.gmra.mxu0 %v699
      %v781 = vpop.f32.mrf.mxu0
      %v782 = vadd.f32 %v632, %v781
      %v783 = vpop.f32.mrf.mxu0
      %v784 = vadd.f32 %v632, %v783
      %785 = vmatmul.bf16.gmra.mxu0 %v702
      %v786 = vpop.f32.mrf.mxu0
      %v787 = vadd.f32 %v632, %v786
      %v788 = vpop.f32.mrf.mxu0
      %v789 = vadd.f32 %v632, %v788
      %790 = vmatmul.bf16.gmra.mxu0 %v705
      %v791 = vpop.f32.mrf.mxu0
      %v792 = vadd.f32 %v632, %v791
      %v793 = vpop.f32.mrf.mxu0
      %v794 = vadd.f32 %v632, %v793
      %795 = vdwg.mxu0
      %v796 = vmul.f32 %v717, 0.125
      %v797 = vmul.f32 %v719, 0.125
      %v798 = vmul.f32 %v722, 0.125
      %v799 = vmul.f32 %v724, 0.125
      %v800 = vmul.f32 %v727, 0.125
      %v801 = vmul.f32 %v729, 0.125
      %v802 = vmul.f32 %v732, 0.125
      %v803 = vmul.f32 %v734, 0.125
      %v804 = vmul.f32 %v737, 0.125
      %v805 = vmul.f32 %v739, 0.125
      %v806 = vmul.f32 %v742, 0.125
      %v807 = vmul.f32 %v744, 0.125
      %v808 = vmul.f32 %v747, 0.125
      %v809 = vmul.f32 %v749, 0.125
      %v810 = vmul.f32 %v752, 0.125
      %v811 = vmul.f32 %v754, 0.125
      %v812 = vmul.f32 %v757, 0.125
      %v813 = vmul.f32 %v759, 0.125
      %v814 = vmul.f32 %v762, 0.125
      %v815 = vmul.f32 %v764, 0.125
      %v816 = vmul.f32 %v767, 0.125
      %v817 = vmul.f32 %v769, 0.125
      %v818 = vmul.f32 %v772, 0.125
      %v819 = vmul.f32 %v774, 0.125
      %v820 = vmul.f32 %v777, 0.125
      %v821 = vmul.f32 %v779, 0.125
      %v822 = vmul.f32 %v782, 0.125
      %v823 = vmul.f32 %v784, 0.125
      %v824 = vmul.f32 %v787, 0.125
      %v825 = vmul.f32 %v789, 0.125
      %v826 = vmul.f32 %v792, 0.125
      %v827 = vmul.f32 %v794, 0.125
      %v828 = vpack.c.bf16 %v796, %v796
      %v829 = vpack.c.bf16 %v797, %v797
      %v830 = vpack.c.bf16 %v798, %v798
      %v831 = vpack.c.bf16 %v799, %v799
      %v832 = vpack.c.bf16 %v800, %v800
      %v833 = vpack.c.bf16 %v801, %v801
      %v834 = vpack.c.bf16 %v802, %v802
      %v835 = vpack.c.bf16 %v803, %v803
      %v836 = vpack.c.bf16 %v804, %v804
      %v837 = vpack.c.bf16 %v805, %v805
      %v838 = vpack.c.bf16 %v806, %v806
      %v839 = vpack.c.bf16 %v807, %v807
      %v840 = vpack.c.bf16 %v808, %v808
      %v841 = vpack.c.bf16 %v809, %v809
      %v842 = vpack.c.bf16 %v810, %v810
      %v843 = vpack.c.bf16 %v811, %v811
      %v844 = vpack.c.bf16 %v812, %v812
      %v845 = vpack.c.bf16 %v813, %v813
      %v846 = vpack.c.bf16 %v814, %v814
      %v847 = vpack.c.bf16 %v815, %v815
      %v848 = vpack.c.bf16 %v816, %v816
      %v849 = vpack.c.bf16 %v817, %v817
      %v850 = vpack.c.bf16 %v818, %v818
      %v851 = vpack.c.bf16 %v819, %v819
      %v852 = vpack.c.bf16 %v820, %v820
      %v853 = vpack.c.bf16 %v821, %v821
      %v854 = vpack.c.bf16 %v822, %v822
      %v855 = vpack.c.bf16 %v823, %v823
      %v856 = vpack.c.bf16 %v824, %v824
      %v857 = vpack.c.bf16 %v825, %v825
      %v858 = vpack.c.bf16 %v826, %v826
      %v859 = vpack.c.bf16 %v827, %v827
      %vm860 = vcmask 519168
      %861 = vst.msk [vmem:[%s479] sm:$0xf] %vm860, %v828
      %862 = vst.msk [vmem:[%s479 + $0x4] sm:$0xf] %vm860, %v829
      %863 = vst.msk [vmem:[%s479 + $0x8] sm:$0xf] %vm860, %v830
      %864 = vst.msk [vmem:[%s479 + $0xc] sm:$0xf] %vm860, %v831
      %865 = vst.msk [vmem:[%s479 + $0x10] sm:$0xf] %vm860, %v832
      %866 = vst.msk [vmem:[%s479 + $0x14] sm:$0xf] %vm860, %v833
      %867 = vst.msk [vmem:[%s479 + $0x18] sm:$0xf] %vm860, %v834
      %868 = vst.msk [vmem:[%s479 + $0x1c] sm:$0xf] %vm860, %v835
      %869 = vst.msk [vmem:[%s479 + $0x20] sm:$0xf] %vm860, %v836
      %870 = vst.msk [vmem:[%s479 + $0x24] sm:$0xf] %vm860, %v837
      %871 = vst.msk [vmem:[%s479 + $0x28] sm:$0xf] %vm860, %v838
      %872 = vst.msk [vmem:[%s479 + $0x2c] sm:$0xf] %vm860, %v839
      %873 = vst.msk [vmem:[%s479 + $0x30] sm:$0xf] %vm860, %v840
      %874 = vst.msk [vmem:[%s479 + $0x34] sm:$0xf] %vm860, %v841
      %875 = vst.msk [vmem:[%s479 + $0x38] sm:$0xf] %vm860, %v842
      %876 = vst.msk [vmem:[%s479 + $0x3c] sm:$0xf] %vm860, %v843
      %877 = vst.msk [vmem:[%s479 + $0x40] sm:$0xf] %vm860, %v844
      %878 = vst.msk [vmem:[%s479 + $0x44] sm:$0xf] %vm860, %v845
      %879 = vst.msk [vmem:[%s479 + $0x48] sm:$0xf] %vm860, %v846
      %880 = vst.msk [vmem:[%s479 + $0x4c] sm:$0xf] %vm860, %v847
      %881 = vst.msk [vmem:[%s479 + $0x50] sm:$0xf] %vm860, %v848
      %882 = vst.msk [vmem:[%s479 + $0x54] sm:$0xf] %vm860, %v849
      %883 = vst.msk [vmem:[%s479 + $0x58] sm:$0xf] %vm860, %v850
      %884 = vst.msk [vmem:[%s479 + $0x5c] sm:$0xf] %vm860, %v851
      %885 = vst.msk [vmem:[%s479 + $0x60] sm:$0xf] %vm860, %v852
      %886 = vst.msk [vmem:[%s479 + $0x64] sm:$0xf] %vm860, %v853
      %887 = vst.msk [vmem:[%s479 + $0x68] sm:$0xf] %vm860, %v854
      %888 = vst.msk [vmem:[%s479 + $0x6c] sm:$0xf] %vm860, %v855
      %889 = vst.msk [vmem:[%s479 + $0x70] sm:$0xf] %vm860, %v856
      %890 = vst.msk [vmem:[%s479 + $0x74] sm:$0xf] %vm860, %v857
      %891 = vst.msk [vmem:[%s479 + $0x78] sm:$0xf] %vm860, %v858
      %892 = vst.msk [vmem:[%s479 + $0x7c] sm:$0xf] %vm860, %v859
      %v893 = vld [vmem:[%s4] sm:$0xf]
      %v894 = vld [vmem:[%s4 + $0x4] sm:$0xf]
      %v895 = vld [vmem:[%s4 + $0x8] sm:$0xf]
      %v896 = vld [vmem:[%s4 + $0xc] sm:$0xf]
      %v897 = vld [vmem:[%s4 + $0x10] sm:$0xf]
      %v898 = vld [vmem:[%s4 + $0x14] sm:$0xf]
      %v899 = vld [vmem:[%s4 + $0x18] sm:$0xf]
      %v900 = vld [vmem:[%s4 + $0x1c] sm:$0xf]
      %v901 = vld [vmem:[%s7] sm:$0x1]
      %v903 = vperm.slane %v901, 0
      %v913 = vunpack.c.l.b16 %v893
      %v914 = vunpack.c.l.b16 %v894
      %v915 = vunpack.c.l.b16 %v895
      %v916 = vunpack.c.l.b16 %v896
      %v917 = vunpack.c.l.b16 %v897
      %v918 = vunpack.c.l.b16 %v898
      %v919 = vunpack.c.l.b16 %v899
      %v920 = vunpack.c.l.b16 %v900
      %v921 = vpack.c.b16 %v914, %v913
      %v922 = vpack.c.b16 %v916, %v915
      %v923 = vpack.c.b16 %v918, %v917
      %v924 = vpack.c.b16 %v920, %v919
      %929 = vmatpush.bf16.msra.mxu0 0
      %930 = vmatpush.bf16.msra.mxu0 0
      %931 = vmatpush.bf16.msra.mxu0 0
      %932 = vmatpush.bf16.msra.mxu0 0
      %933 = vmatpush.bf16.msra.mxu0 %v924
      %934 = vmatpush.bf16.msra.mxu0 %v923
      %935 = vmatpush.bf16.msra.mxu0 %v922
      %936 = vmatpush.bf16.msra.mxu0 %v921
      %937 = vmatmul.bf16.gmra.mxu0 %v660
      %v938 = vpop.f32.mrf.mxu0
      %v939 = vadd.f32 %v903, %v938
      %v940 = vpop.f32.mrf.mxu0
      %v941 = vadd.f32 %v903, %v940
      %942 = vmatmul.bf16.gmra.mxu0 %v663
      %v943 = vpop.f32.mrf.mxu0
      %v944 = vadd.f32 %v903, %v943
      %v945 = vpop.f32.mrf.mxu0
      %v946 = vadd.f32 %v903, %v945
      %947 = vmatmul.bf16.gmra.mxu0 %v666
      %v948 = vpop.f32.mrf.mxu0
      %v949 = vadd.f32 %v903, %v948
      %v950 = vpop.f32.mrf.mxu0
      %v951 = vadd.f32 %v903, %v950
      %952 = vmatmul.bf16.gmra.mxu0 %v669
      %v953 = vpop.f32.mrf.mxu0
      %v954 = vadd.f32 %v903, %v953
      %v955 = vpop.f32.mrf.mxu0
      %v956 = vadd.f32 %v903, %v955
      %957 = vmatmul.bf16.gmra.mxu0 %v672
      %v958 = vpop.f32.mrf.mxu0
      %v959 = vadd.f32 %v903, %v958
      %v960 = vpop.f32.mrf.mxu0
      %v961 = vadd.f32 %v903, %v960
      %962 = vmatmul.bf16.gmra.mxu0 %v675
      %v963 = vpop.f32.mrf.mxu0
      %v964 = vadd.f32 %v903, %v963
      %v965 = vpop.f32.mrf.mxu0
      %v966 = vadd.f32 %v903, %v965
      %967 = vmatmul.bf16.gmra.mxu0 %v678
      %v968 = vpop.f32.mrf.mxu0
      %v969 = vadd.f32 %v903, %v968
      %v970 = vpop.f32.mrf.mxu0
      %v971 = vadd.f32 %v903, %v970
      %972 = vmatmul.bf16.gmra.mxu0 %v681
      %v973 = vpop.f32.mrf.mxu0
      %v974 = vadd.f32 %v903, %v973
      %v975 = vpop.f32.mrf.mxu0
      %v976 = vadd.f32 %v903, %v975
      %977 = vmatmul.bf16.gmra.mxu0 %v684
      %v978 = vpop.f32.mrf.mxu0
      %v979 = vadd.f32 %v903, %v978
      %v980 = vpop.f32.mrf.mxu0
      %v981 = vadd.f32 %v903, %v980
      %982 = vmatmul.bf16.gmra.mxu0 %v687
      %v983 = vpop.f32.mrf.mxu0
      %v984 = vadd.f32 %v903, %v983
      %v985 = vpop.f32.mrf.mxu0
      %v986 = vadd.f32 %v903, %v985
      %987 = vmatmul.bf16.gmra.mxu0 %v690
      %v988 = vpop.f32.mrf.mxu0
      %v989 = vadd.f32 %v903, %v988
      %v990 = vpop.f32.mrf.mxu0
      %v991 = vadd.f32 %v903, %v990
      %992 = vmatmul.bf16.gmra.mxu0 %v693
      %v993 = vpop.f32.mrf.mxu0
      %v994 = vadd.f32 %v903, %v993
      %v995 = vpop.f32.mrf.mxu0
      %v996 = vadd.f32 %v903, %v995
      %997 = vmatmul.bf16.gmra.mxu0 %v696
      %v998 = vpop.f32.mrf.mxu0
      %v999 = vadd.f32 %v903, %v998
      %v1000 = vpop.f32.mrf.mxu0
      %v1001 = vadd.f32 %v903, %v1000
      %1002 = vmatmul.bf16.gmra.mxu0 %v699
      %v1003 = vpop.f32.mrf.mxu0
      %v1004 = vadd.f32 %v903, %v1003
      %v1005 = vpop.f32.mrf.mxu0
      %v1006 = vadd.f32 %v903, %v1005
      %1007 = vmatmul.bf16.gmra.mxu0 %v702
      %v1008 = vpop.f32.mrf.mxu0
      %v1009 = vadd.f32 %v903, %v1008
      %v1010 = vpop.f32.mrf.mxu0
      %v1011 = vadd.f32 %v903, %v1010
      %1012 = vmatmul.bf16.gmra.mxu0 %v705
      %v1013 = vpop.f32.mrf.mxu0
      %v1014 = vadd.f32 %v903, %v1013
      %v1015 = vpop.f32.mrf.mxu0
      %v1016 = vadd.f32 %v903, %v1015
      %1017 = vdwg.mxu0
      %v1018 = vpack.c.bf16 %v939, %v939
      %v1019 = vpack.c.bf16 %v941, %v941
      %v1020 = vpack.c.bf16 %v944, %v944
      %v1021 = vpack.c.bf16 %v946, %v946
      %v1022 = vpack.c.bf16 %v949, %v949
      %v1023 = vpack.c.bf16 %v951, %v951
      %v1024 = vpack.c.bf16 %v954, %v954
      %v1025 = vpack.c.bf16 %v956, %v956
      %v1026 = vpack.c.bf16 %v959, %v959
      %v1027 = vpack.c.bf16 %v961, %v961
      %v1028 = vpack.c.bf16 %v964, %v964
      %v1029 = vpack.c.bf16 %v966, %v966
      %v1030 = vpack.c.bf16 %v969, %v969
      %v1031 = vpack.c.bf16 %v971, %v971
      %v1032 = vpack.c.bf16 %v974, %v974
      %v1033 = vpack.c.bf16 %v976, %v976
      %v1034 = vpack.c.bf16 %v979, %v979
      %v1035 = vpack.c.bf16 %v981, %v981
      %v1036 = vpack.c.bf16 %v984, %v984
      %v1037 = vpack.c.bf16 %v986, %v986
      %v1038 = vpack.c.bf16 %v989, %v989
      %v1039 = vpack.c.bf16 %v991, %v991
      %v1040 = vpack.c.bf16 %v994, %v994
      %v1041 = vpack.c.bf16 %v996, %v996
      %v1042 = vpack.c.bf16 %v999, %v999
      %v1043 = vpack.c.bf16 %v1001, %v1001
      %v1044 = vpack.c.bf16 %v1004, %v1004
      %v1045 = vpack.c.bf16 %v1006, %v1006
      %v1046 = vpack.c.bf16 %v1009, %v1009
      %v1047 = vpack.c.bf16 %v1011, %v1011
      %v1048 = vpack.c.bf16 %v1014, %v1014
      %v1049 = vpack.c.bf16 %v1016, %v1016
      %1050 = vst.msk [vmem:[%s489] sm:$0xf] %vm860, %v1018
      %1051 = vst.msk [vmem:[%s489 + $0x4] sm:$0xf] %vm860, %v1019
      %1052 = vst.msk [vmem:[%s489 + $0x8] sm:$0xf] %vm860, %v1020
      %1053 = vst.msk [vmem:[%s489 + $0xc] sm:$0xf] %vm860, %v1021
      %1054 = vst.msk [vmem:[%s489 + $0x10] sm:$0xf] %vm860, %v1022
      %1055 = vst.msk [vmem:[%s489 + $0x14] sm:$0xf] %vm860, %v1023
      %1056 = vst.msk [vmem:[%s489 + $0x18] sm:$0xf] %vm860, %v1024
      %1057 = vst.msk [vmem:[%s489 + $0x1c] sm:$0xf] %vm860, %v1025
      %1058 = vst.msk [vmem:[%s489 + $0x20] sm:$0xf] %vm860, %v1026
      %1059 = vst.msk [vmem:[%s489 + $0x24] sm:$0xf] %vm860, %v1027
      %1060 = vst.msk [vmem:[%s489 + $0x28] sm:$0xf] %vm860, %v1028
      %1061 = vst.msk [vmem:[%s489 + $0x2c] sm:$0xf] %vm860, %v1029
      %1062 = vst.msk [vmem:[%s489 + $0x30] sm:$0xf] %vm860, %v1030
      %1063 = vst.msk [vmem:[%s489 + $0x34] sm:$0xf] %vm860, %v1031
      %1064 = vst.msk [vmem:[%s489 + $0x38] sm:$0xf] %vm860, %v1032
      %1065 = vst.msk [vmem:[%s489 + $0x3c] sm:$0xf] %vm860, %v1033
      %1066 = vst.msk [vmem:[%s489 + $0x40] sm:$0xf] %vm860, %v1034
      %1067 = vst.msk [vmem:[%s489 + $0x44] sm:$0xf] %vm860, %v1035
      %1068 = vst.msk [vmem:[%s489 + $0x48] sm:$0xf] %vm860, %v1036
      %1069 = vst.msk [vmem:[%s489 + $0x4c] sm:$0xf] %vm860, %v1037
      %1070 = vst.msk [vmem:[%s489 + $0x50] sm:$0xf] %vm860, %v1038
      %1071 = vst.msk [vmem:[%s489 + $0x54] sm:$0xf] %vm860, %v1039
      %1072 = vst.msk [vmem:[%s489 + $0x58] sm:$0xf] %vm860, %v1040
      %1073 = vst.msk [vmem:[%s489 + $0x5c] sm:$0xf] %vm860, %v1041
      %1074 = vst.msk [vmem:[%s489 + $0x60] sm:$0xf] %vm860, %v1042
      %1075 = vst.msk [vmem:[%s489 + $0x64] sm:$0xf] %vm860, %v1043
      %1076 = vst.msk [vmem:[%s489 + $0x68] sm:$0xf] %vm860, %v1044
      %1077 = vst.msk [vmem:[%s489 + $0x6c] sm:$0xf] %vm860, %v1045
      %1078 = vst.msk [vmem:[%s489 + $0x70] sm:$0xf] %vm860, %v1046
      %1079 = vst.msk [vmem:[%s489 + $0x74] sm:$0xf] %vm860, %v1047
      %1080 = vst.msk [vmem:[%s489 + $0x78] sm:$0xf] %vm860, %v1048
      %1081 = vst.msk [vmem:[%s489 + $0x7c] sm:$0xf] %vm860, %v1049
      %v1082 = vld [vmem:[%s5] sm:$0xf]
      %v1083 = vld [vmem:[%s5 + $0x4] sm:$0xf]
      %v1084 = vld [vmem:[%s5 + $0x8] sm:$0xf]
      %v1085 = vld [vmem:[%s5 + $0xc] sm:$0xf]
      %v1086 = vld [vmem:[%s5 + $0x10] sm:$0xf]
      %v1087 = vld [vmem:[%s5 + $0x14] sm:$0xf]
      %v1088 = vld [vmem:[%s5 + $0x18] sm:$0xf]
      %v1089 = vld [vmem:[%s5 + $0x1c] sm:$0xf]
      %v1090 = vld [vmem:[%s8] sm:$0x1]
      %v1092 = vperm.slane %v1090, 0
      %v1102 = vunpack.c.l.b16 %v1082
      %v1103 = vunpack.c.l.b16 %v1083
      %v1104 = vunpack.c.l.b16 %v1084
      %v1105 = vunpack.c.l.b16 %v1085
      %v1106 = vunpack.c.l.b16 %v1086
      %v1107 = vunpack.c.l.b16 %v1087
      %v1108 = vunpack.c.l.b16 %v1088
      %v1109 = vunpack.c.l.b16 %v1089
      %v1110 = vpack.c.b16 %v1103, %v1102
      %v1111 = vpack.c.b16 %v1105, %v1104
      %v1112 = vpack.c.b16 %v1107, %v1106
      %v1113 = vpack.c.b16 %v1109, %v1108
      %1118 = vmatpush.bf16.msra.mxu0 0
      %1119 = vmatpush.bf16.msra.mxu0 0
      %1120 = vmatpush.bf16.msra.mxu0 0
      %1121 = vmatpush.bf16.msra.mxu0 0
      %1122 = vmatpush.bf16.msra.mxu0 %v1113
      %1123 = vmatpush.bf16.msra.mxu0 %v1112
      %1124 = vmatpush.bf16.msra.mxu0 %v1111
      %1125 = vmatpush.bf16.msra.mxu0 %v1110
      %1126 = vmatmul.bf16.gmra.mxu0 %v660
      %v1127 = vpop.f32.mrf.mxu0
      %v1128 = vadd.f32 %v1092, %v1127
      %v1129 = vpop.f32.mrf.mxu0
      %v1130 = vadd.f32 %v1092, %v1129
      %1131 = vmatmul.bf16.gmra.mxu0 %v663
      %v1132 = vpop.f32.mrf.mxu0
      %v1133 = vadd.f32 %v1092, %v1132
      %v1134 = vpop.f32.mrf.mxu0
      %v1135 = vadd.f32 %v1092, %v1134
      %1136 = vmatmul.bf16.gmra.mxu0 %v666
      %v1137 = vpop.f32.mrf.mxu0
      %v1138 = vadd.f32 %v1092, %v1137
      %v1139 = vpop.f32.mrf.mxu0
      %v1140 = vadd.f32 %v1092, %v1139
      %1141 = vmatmul.bf16.gmra.mxu0 %v669
      %v1142 = vpop.f32.mrf.mxu0
      %v1143 = vadd.f32 %v1092, %v1142
      %v1144 = vpop.f32.mrf.mxu0
      %v1145 = vadd.f32 %v1092, %v1144
      %1146 = vmatmul.bf16.gmra.mxu0 %v672
      %v1147 = vpop.f32.mrf.mxu0
      %v1148 = vadd.f32 %v1092, %v1147
      %v1149 = vpop.f32.mrf.mxu0
      %v1150 = vadd.f32 %v1092, %v1149
      %1151 = vmatmul.bf16.gmra.mxu0 %v675
      %v1152 = vpop.f32.mrf.mxu0
      %v1153 = vadd.f32 %v1092, %v1152
      %v1154 = vpop.f32.mrf.mxu0
      %v1155 = vadd.f32 %v1092, %v1154
      %1156 = vmatmul.bf16.gmra.mxu0 %v678
      %v1157 = vpop.f32.mrf.mxu0
      %v1158 = vadd.f32 %v1092, %v1157
      %v1159 = vpop.f32.mrf.mxu0
      %v1160 = vadd.f32 %v1092, %v1159
      %1161 = vmatmul.bf16.gmra.mxu0 %v681
      %v1162 = vpop.f32.mrf.mxu0
      %v1163 = vadd.f32 %v1092, %v1162
      %v1164 = vpop.f32.mrf.mxu0
      %v1165 = vadd.f32 %v1092, %v1164
      %1166 = vmatmul.bf16.gmra.mxu0 %v684
      %v1167 = vpop.f32.mrf.mxu0
      %v1168 = vadd.f32 %v1092, %v1167
      %v1169 = vpop.f32.mrf.mxu0
      %v1170 = vadd.f32 %v1092, %v1169
      %1171 = vmatmul.bf16.gmra.mxu0 %v687
      %v1172 = vpop.f32.mrf.mxu0
      %v1173 = vadd.f32 %v1092, %v1172
      %v1174 = vpop.f32.mrf.mxu0
      %v1175 = vadd.f32 %v1092, %v1174
      %1176 = vmatmul.bf16.gmra.mxu0 %v690
      %v1177 = vpop.f32.mrf.mxu0
      %v1178 = vadd.f32 %v1092, %v1177
      %v1179 = vpop.f32.mrf.mxu0
      %v1180 = vadd.f32 %v1092, %v1179
      %1181 = vmatmul.bf16.gmra.mxu0 %v693
      %v1182 = vpop.f32.mrf.mxu0
      %v1183 = vadd.f32 %v1092, %v1182
      %v1184 = vpop.f32.mrf.mxu0
      %v1185 = vadd.f32 %v1092, %v1184
      %1186 = vmatmul.bf16.gmra.mxu0 %v696
      %v1187 = vpop.f32.mrf.mxu0
      %v1188 = vadd.f32 %v1092, %v1187
      %v1189 = vpop.f32.mrf.mxu0
      %v1190 = vadd.f32 %v1092, %v1189
      %1191 = vmatmul.bf16.gmra.mxu0 %v699
      %v1192 = vpop.f32.mrf.mxu0
      %v1193 = vadd.f32 %v1092, %v1192
      %v1194 = vpop.f32.mrf.mxu0
      %v1195 = vadd.f32 %v1092, %v1194
      %1196 = vmatmul.bf16.gmra.mxu0 %v702
      %v1197 = vpop.f32.mrf.mxu0
      %v1198 = vadd.f32 %v1092, %v1197
      %v1199 = vpop.f32.mrf.mxu0
      %v1200 = vadd.f32 %v1092, %v1199
      %1201 = vmatmul.bf16.gmra.mxu0 %v705
      %v1202 = vpop.f32.mrf.mxu0
      %v1203 = vadd.f32 %v1092, %v1202
      %v1204 = vpop.f32.mrf.mxu0
      %v1205 = vadd.f32 %v1092, %v1204
      %1206 = vdwg.mxu0
      %v1207 = vpack.c.bf16 %v1128, %v1128
      %v1208 = vpack.c.bf16 %v1130, %v1130
      %v1209 = vpack.c.bf16 %v1133, %v1133
      %v1210 = vpack.c.bf16 %v1135, %v1135
      %v1211 = vpack.c.bf16 %v1138, %v1138
      %v1212 = vpack.c.bf16 %v1140, %v1140
      %v1213 = vpack.c.bf16 %v1143, %v1143
      %v1214 = vpack.c.bf16 %v1145, %v1145
      %v1215 = vpack.c.bf16 %v1148, %v1148
      %v1216 = vpack.c.bf16 %v1150, %v1150
      %v1217 = vpack.c.bf16 %v1153, %v1153
      %v1218 = vpack.c.bf16 %v1155, %v1155
      %v1219 = vpack.c.bf16 %v1158, %v1158
      %v1220 = vpack.c.bf16 %v1160, %v1160
      %v1221 = vpack.c.bf16 %v1163, %v1163
      %v1222 = vpack.c.bf16 %v1165, %v1165
      %v1223 = vpack.c.bf16 %v1168, %v1168
      %v1224 = vpack.c.bf16 %v1170, %v1170
      %v1225 = vpack.c.bf16 %v1173, %v1173
      %v1226 = vpack.c.bf16 %v1175, %v1175
      %v1227 = vpack.c.bf16 %v1178, %v1178
      %v1228 = vpack.c.bf16 %v1180, %v1180
      %v1229 = vpack.c.bf16 %v1183, %v1183
      %v1230 = vpack.c.bf16 %v1185, %v1185
      %v1231 = vpack.c.bf16 %v1188, %v1188
      %v1232 = vpack.c.bf16 %v1190, %v1190
      %v1233 = vpack.c.bf16 %v1193, %v1193
      %v1234 = vpack.c.bf16 %v1195, %v1195
      %v1235 = vpack.c.bf16 %v1198, %v1198
      %v1236 = vpack.c.bf16 %v1200, %v1200
      %v1237 = vpack.c.bf16 %v1203, %v1203
      %v1238 = vpack.c.bf16 %v1205, %v1205
      %1239 = vst.msk [vmem:[%s499] sm:$0xf] %vm860, %v1207
      %1240 = vst.msk [vmem:[%s499 + $0x4] sm:$0xf] %vm860, %v1208
      %1241 = vst.msk [vmem:[%s499 + $0x8] sm:$0xf] %vm860, %v1209
      %1242 = vst.msk [vmem:[%s499 + $0xc] sm:$0xf] %vm860, %v1210
      %1243 = vst.msk [vmem:[%s499 + $0x10] sm:$0xf] %vm860, %v1211
      %1244 = vst.msk [vmem:[%s499 + $0x14] sm:$0xf] %vm860, %v1212
      %1245 = vst.msk [vmem:[%s499 + $0x18] sm:$0xf] %vm860, %v1213
      %1246 = vst.msk [vmem:[%s499 + $0x1c] sm:$0xf] %vm860, %v1214
      %1247 = vst.msk [vmem:[%s499 + $0x20] sm:$0xf] %vm860, %v1215
      %1248 = vst.msk [vmem:[%s499 + $0x24] sm:$0xf] %vm860, %v1216
      %1249 = vst.msk [vmem:[%s499 + $0x28] sm:$0xf] %vm860, %v1217
      %1250 = vst.msk [vmem:[%s499 + $0x2c] sm:$0xf] %vm860, %v1218
      %1251 = vst.msk [vmem:[%s499 + $0x30] sm:$0xf] %vm860, %v1219
      %1252 = vst.msk [vmem:[%s499 + $0x34] sm:$0xf] %vm860, %v1220
      %1253 = vst.msk [vmem:[%s499 + $0x38] sm:$0xf] %vm860, %v1221
      %1254 = vst.msk [vmem:[%s499 + $0x3c] sm:$0xf] %vm860, %v1222
      %1255 = vst.msk [vmem:[%s499 + $0x40] sm:$0xf] %vm860, %v1223
      %1256 = vst.msk [vmem:[%s499 + $0x44] sm:$0xf] %vm860, %v1224
      %1257 = vst.msk [vmem:[%s499 + $0x48] sm:$0xf] %vm860, %v1225
      %1258 = vst.msk [vmem:[%s499 + $0x4c] sm:$0xf] %vm860, %v1226
      %1259 = vst.msk [vmem:[%s499 + $0x50] sm:$0xf] %vm860, %v1227
      %1260 = vst.msk [vmem:[%s499 + $0x54] sm:$0xf] %vm860, %v1228
      %1261 = vst.msk [vmem:[%s499 + $0x58] sm:$0xf] %vm860, %v1229
      %1262 = vst.msk [vmem:[%s499 + $0x5c] sm:$0xf] %vm860, %v1230
      %1263 = vst.msk [vmem:[%s499 + $0x60] sm:$0xf] %vm860, %v1231
      %1264 = vst.msk [vmem:[%s499 + $0x64] sm:$0xf] %vm860, %v1232
      %1265 = vst.msk [vmem:[%s499 + $0x68] sm:$0xf] %vm860, %v1233
      %1266 = vst.msk [vmem:[%s499 + $0x6c] sm:$0xf] %vm860, %v1234
      %1267 = vst.msk [vmem:[%s499 + $0x70] sm:$0xf] %vm860, %v1235
      %1268 = vst.msk [vmem:[%s499 + $0x74] sm:$0xf] %vm860, %v1236
      %1269 = vst.msk [vmem:[%s499 + $0x78] sm:$0xf] %vm860, %v1237
      %1270 = vst.msk [vmem:[%s499 + $0x7c] sm:$0xf] %vm860, %v1238
      %s1271 = smul.u32 32, %s28
      %p1272 = scmp.lt.s32.totalorder %s27, 1
      %s1273 = scalar_select %p1272, %s27, 1
      %p1274 = scmp.lt.s32.totalorder %s1271, 31
      %s1275 = scalar_select %p1274, %s1271, 31
      %s1276 = smul.addr %s1273, 32
      %s1277 = sadd.s32 %s1275, %s1276
      %s1278 = smul.addr %s1277, 4
      %s1279 = scalar_lea.vmem %s9, %s1278
      %s1280 = smul.u32 32, %s28
      %p1281 = scmp.lt.s32.totalorder %s27, 1
      %s1282 = scalar_select %p1281, %s27, 1
      %p1283 = scmp.lt.s32.totalorder %s1280, 31
      %s1284 = scalar_select %p1283, %s1280, 31
      %s1285 = smul.addr %s1282, 32
      %s1286 = sadd.s32 %s1284, %s1285
      %s1287 = smul.addr %s1286, 4
      %s1288 = scalar_lea.vmem %s10, %s1287
      %s1289 = smul.u32 32, %s28
      %p1290 = scmp.lt.s32.totalorder %s27, 1
      %s1291 = scalar_select %p1290, %s27, 1
      %p1292 = scmp.lt.s32.totalorder %s1289, 31
      %s1293 = scalar_select %p1292, %s1289, 31
      %s1294 = smul.addr %s1291, 32
      %s1295 = sadd.s32 %s1293, %s1294
      %s1296 = smul.addr %s1295, 4
      %s1297 = scalar_lea.vmem %s11, %s1296
      // Predicated region
      $region57: #{tpu_custom_call.1} parent=55 // pred_check
        %p1298 = pneg %p261
      $region58: #{tpu_custom_call.1} parent=55 // pred_check_branch
        %1300 = sbr.rel (%p1298) target = $region60
      $region59: #{tpu_custom_call.1} parent=55 // pred_region
        %s1301 = smul.u32 32, %s28
      $region60: #{tpu_custom_call.1} parent=55 // pred_fallthru
        _
      // Predicated region
      $region61: #{tpu_custom_call.1} parent=55 // pred_check
        %p1302 = pneg %p289
      $region62: #{tpu_custom_call.1} parent=55 // pred_check_branch
        %1304 = sbr.rel (%p1302) target = $region64
      $region63: #{tpu_custom_call.1} parent=55 // pred_region
        %s1305 = smul.u32 32, %s28
      $region64: #{tpu_custom_call.1} parent=55 // pred_fallthru
        _
      // Predicated region
      $region65: #{tpu_custom_call.1} parent=55 // pred_check
        %p1306 = pneg %p317
      $region66: #{tpu_custom_call.1} parent=55 // pred_check_branch
        %1308 = sbr.rel (%p1306) target = $region68
      $region67: #{tpu_custom_call.1} parent=55 // pred_region
        %s1309 = smul.u32 32, %s28
      $region68: #{tpu_custom_call.1} parent=55 // pred_fallthru
        _
    $region56: #{tpu_custom_call.1} parent=5 // pred_fallthru
      _
    %p1310 = scmp.le.s32.totalorder 2, %s18
    // Predicated region
    $region69: #{tpu_custom_call.1} parent=5 // pred_check
      %p1311 = pneg %p1310
    $region70: #{tpu_custom_call.1} parent=5 // pred_check_branch
      %1313 = sbr.rel (%p1311) target = $region72
    $region71: #{tpu_custom_call.1} parent=5 // pred_region
      %s1314 = ssub.s32 %s18, 2
      // Predicated region
      $region73: #{tpu_custom_call.1} parent=71 // pred_check
        %p1315 = pneg %p267
      $region74: #{tpu_custom_call.1} parent=71 // pred_check_branch
        %1317 = sbr.rel (%p1315) target = $region76
      $region75: #{tpu_custom_call.1} parent=71 // pred_region
        %s1318 = smul.u32 32, %s30
        %p1319 = scmp.lt.s32.totalorder %s29, 1
        %s1320 = scalar_select %p1319, %s29, 1
        %p1321 = scmp.lt.s32.totalorder %s1318, 31
        %s1322 = scalar_select %p1321, %s1318, 31
        %s1323 = smul.addr %s1320, 32
        %s1324 = sadd.s32 %s1322, %s1323
        %s1325 = smul.addr %s1324, 4
        %s1326 = scalar_lea.vmem %s9, %s1325
      $region76: #{tpu_custom_call.1} parent=71 // pred_fallthru
        _
      // Predicated region
      $region77: #{tpu_custom_call.1} parent=71 // pred_check
        %p1327 = pneg %p295
      $region78: #{tpu_custom_call.1} parent=71 // pred_check_branch
        %1329 = sbr.rel (%p1327) target = $region80
      $region79: #{tpu_custom_call.1} parent=71 // pred_region
        %s1330 = smul.u32 32, %s30
        %p1331 = scmp.lt.s32.totalorder %s29, 1
        %s1332 = scalar_select %p1331, %s29, 1
        %p1333 = scmp.lt.s32.totalorder %s1330, 31
        %s1334 = scalar_select %p1333, %s1330, 31
        %s1335 = smul.addr %s1332, 32
        %s1336 = sadd.s32 %s1334, %s1335
        %s1337 = smul.addr %s1336, 4
        %s1338 = scalar_lea.vmem %s10, %s1337
      $region80: #{tpu_custom_call.1} parent=71 // pred_fallthru
        _
      // Predicated region
      $region81: #{tpu_custom_call.1} parent=71 // pred_check
        %p1339 = pneg %p323
      $region82: #{tpu_custom_call.1} parent=71 // pred_check_branch
        %1341 = sbr.rel (%p1339) target = $region84
      $region83: #{tpu_custom_call.1} parent=71 // pred_region
        %s1342 = smul.u32 32, %s30
        %p1343 = scmp.lt.s32.totalorder %s29, 1
        %s1344 = scalar_select %p1343, %s29, 1
        %p1345 = scmp.lt.s32.totalorder %s1342, 31
        %s1346 = scalar_select %p1345, %s1342, 31
        %s1347 = smul.addr %s1344, 32
        %s1348 = sadd.s32 %s1346, %s1347
        %s1349 = smul.addr %s1348, 4
        %s1350 = scalar_lea.vmem %s11, %s1349
      $region84: #{tpu_custom_call.1} parent=71 // pred_fallthru
        _
    $region72: #{tpu_custom_call.1} parent=5 // pred_fallthru
      _
  $region6: #{tpu_custom_call.1} parent=0 // loop_footer
    %s22 = sadd.s32 1, %s18
  $region7: #{tpu_custom_call.1} parent=0 // loop_footer_branch
    %17 = sbr.rel target = $region3
  $region8: #{tpu_custom_call.1} parent=0 // loop_exit
    _

</llo_original>
